<compile_context>
chip_gen: v6e
topology: v6e:2x2x1
jax: 0.10.0
libtpu: 0.0.40
codegen_flags: <defaults>
</compile_context>

<pallas_src>
import jax
import jax.numpy as jnp
from jax import lax
from jax.experimental import pallas as pl
from jax.experimental.pallas import tpu as pltpu

BN_EPS = 1e-5
_VMEM_TILE_BUDGET = 4 * 1024 * 1024      # target per-tile working set (double-buffer headroom)
_VMEM_LIMIT_BYTES = 64 * 1024 * 1024


def _largest_divisor_leq(n, cap):
    cap = max(1, min(n, cap))
    for d in range(cap, 0, -1):
        if n % d == 0:
            return d
    return 1


def _conv_stats_kernel(xt_ref, w_ref, y_ref, s1_ref, s2_ref):
    """Phase 1: 3x3 conv on one haloed row-tile via 9 accumulated MXU dots
    (in-kernel im2col), plus per-channel sum / sum-of-squares accumulation
    for the BatchNorm batch statistics."""
    THp2, Wp, cin = xt_ref.shape          # haloed tile: (TH+2, W+2, Cin)
    TH, W = THp2 - 2, Wp - 2
    cout_pad = w_ref.shape[-1]

    # Init the grid-resident stats accumulators on the first grid step.
    @pl.when(pl.program_id(0) == 0)
    def _():
        s1_ref[...] = jnp.zeros_like(s1_ref)
        s2_ref[...] = jnp.zeros_like(s2_ref)

    x = xt_ref[...]                        # (TH+2, W+2, Cin) bf16
    acc = jnp.zeros((TH * W, cout_pad), jnp.float32)
    for kh in range(3):
        for kw in range(3):
            xwin = x[kh:kh + TH, kw:kw + W, :]        # shifted window (TH, W, Cin)
            xmat = xwin.reshape(TH * W, cin)          # im2col column for this tap
            acc = acc + jnp.dot(xmat, w_ref[kh, kw],
                                preferred_element_type=jnp.float32)

    y_ref[...] = acc                                   # conv result for this tile (f32)
    s1_ref[...] += jnp.sum(acc, axis=0, keepdims=True)          # per-channel sum
    s2_ref[...] += jnp.sum(acc * acc, axis=0, keepdims=True)    # per-channel sum of squares
    # TODO(synk): BatchNorm2d running_mean/running_var momentum update (training side
    # effect of nn.BatchNorm2d) is not modeled; only the forward activation is reproduced.


def _bn_relu_kernel(y_ref, scale_ref, shift_ref, o_ref):
    """Phase 2: normalize + ReLU.  One fma + one max per element (scale/shift prefolded)."""
    o_ref[...] = jnp.maximum(y_ref[...] * scale_ref[...] + shift_ref[...], 0.0)


def conv_block_forward(x_nchw, conv_weight, bn_gamma, bn_beta, *, eps=BN_EPS):
    """x_nchw: (N, Cin, H, W) f32; conv_weight: (Cout, Cin, 3, 3) f32 (PyTorch layout);
    bn_gamma, bn_beta: (Cout,) f32.  Returns (N, Cout, H, W) f32."""
    N, Cin, H, W = x_nchw.shape
    Cout, Cin_w, KH, KW = conv_weight.shape
    assert (KH, KW) == (3, 3) and Cin_w == Cin
    Cout_pad = ((Cout + 127) // 128) * 128             # lane-dense output / MXU N axis

    # ---- glue: NCHW -> NHWC, spatial zero-pad, bf16 matmul operand ----
    x = jnp.transpose(x_nchw, (0, 2, 3, 1)).astype(jnp.bfloat16)       # (N, H, W, Cin)
    xp = jnp.pad(x, ((0, 0), (1, 1), (1, 1), (0, 0)))                  # (N, H+2, W+2, Cin)
    Wp = W + 2

    # ---- row-tile size: largest divisor of H that keeps the tile within budget ----
    bytes_per_row = W * Cout_pad * 4 * 2 + Wp * Cin * 2 * 2            # y out + input (x2 buffers)
    TH = _largest_divisor_leq(H, _VMEM_TILE_BUDGET // max(1, bytes_per_row))
    RB = H // TH
    NT = N * RB

    # Overlapping haloed row-tiles (~(TH+2)/TH duplication — replaces the 9x im2col blowup).
    tiles = jnp.stack([xp[:, r * TH:r * TH + TH + 2] for r in range(RB)], axis=1)
    tiles = tiles.reshape(NT, TH + 2, Wp, Cin)                         # (NT, TH+2, W+2, Cin)

    # conv weight (Cout, Cin, 3, 3) -> (3, 3, Cin, Cout_pad), zero-padded, bf16
    w = jnp.transpose(conv_weight, (2, 3, 1, 0))
    w = jnp.pad(w, ((0, 0), (0, 0), (0, 0), (0, Cout_pad - Cout))).astype(jnp.bfloat16)

    # ---- phase 1: streaming conv + batch-stat accumulation ----
    y, s1, s2 = pl.pallas_call(
        _conv_stats_kernel,
        out_shape=(
            jax.ShapeDtypeStruct((NT, TH * W, Cout_pad), jnp.float32),   # conv result
            jax.ShapeDtypeStruct((1, Cout_pad), jnp.float32),            # sum
            jax.ShapeDtypeStruct((1, Cout_pad), jnp.float32),            # sum of squares
        ),
        grid=(NT,),
        in_specs=[
            pl.BlockSpec((None, TH + 2, Wp, Cin), lambda t: (t, 0, 0, 0)),
            pl.BlockSpec((3, 3, Cin, Cout_pad), lambda t: (0, 0, 0, 0)),     # resident weight
        ],
        out_specs=(
            pl.BlockSpec((None, TH * W, Cout_pad), lambda t: (t, 0, 0)),
            pl.BlockSpec((1, Cout_pad), lambda t: (0, 0)),                   # resident accumulator
            pl.BlockSpec((1, Cout_pad), lambda t: (0, 0)),                   # resident accumulator
        ),
        compiler_params=pltpu.CompilerParams(
            dimension_semantics=("arbitrary",),
            vmem_limit_bytes=_VMEM_LIMIT_BYTES),
    )(tiles, w)

    # ---- fold BN affine once (O(Cout) work, plain JAX) ----
    cnt = jnp.float32(N * H * W)
    mean = s1 / cnt                                              # (1, Cout_pad)
    var = jnp.maximum(s2 / cnt - mean * mean, 0.0)               # biased var, clamped >= 0
    inv_std = lax.rsqrt(var + eps)
    gamma_pad = jnp.pad(bn_gamma.astype(jnp.float32), (0, Cout_pad - Cout)).reshape(1, Cout_pad)
    beta_pad = jnp.pad(bn_beta.astype(jnp.float32), (0, Cout_pad - Cout)).reshape(1, Cout_pad)
    scale = gamma_pad * inv_std
    shift = beta_pad - mean * scale

    # ---- phase 2: streaming normalize + ReLU ----
    out3 = pl.pallas_call(
        _bn_relu_kernel,
        out_shape=jax.ShapeDtypeStruct((NT, TH * W, Cout_pad), jnp.float32),
        grid=(NT,),
        in_specs=[
            pl.BlockSpec((None, TH * W, Cout_pad), lambda t: (t, 0, 0)),
            pl.BlockSpec((1, Cout_pad), lambda t: (0, 0)),
            pl.BlockSpec((1, Cout_pad), lambda t: (0, 0)),
        ],
        out_specs=pl.BlockSpec((None, TH * W, Cout_pad), lambda t: (t, 0, 0)),
        compiler_params=pltpu.CompilerParams(
            dimension_semantics=("parallel",),
            vmem_limit_bytes=_VMEM_LIMIT_BYTES),
    )(y, scale, shift)

    # ---- glue: strip channel padding, back to NCHW ----
    out = out3.reshape(N, H, W, Cout_pad)[..., :Cout]
    return jnp.transpose(out, (0, 3, 1, 2))


def _reference_forward(x_nchw, conv_weight, bn_gamma, bn_beta, eps=BN_EPS):
    """Plain-JAX reference matching PyTorch ConvBlock forward (training-mode BN).
    Conv operands cast to bf16 (f32 accumulation) to match the kernel's MXU path."""
    y = lax.conv_general_dilated(
        x_nchw.astype(jnp.bfloat16), conv_weight.astype(jnp.bfloat16),
        window_strides=(1, 1), padding=((1, 1), (1, 1)),
        dimension_numbers=("NCHW", "OIHW", "NCHW"),
        preferred_element_type=jnp.float32)
    mean = jnp.mean(y, axis=(0, 2, 3), keepdims=True)
    var = jnp.mean((y - mean) ** 2, axis=(0, 2, 3), keepdims=True)
    y = (y - mean) / jnp.sqrt(var + eps)
    y = y * bn_gamma.reshape(1, -1, 1, 1) + bn_beta.reshape(1, -1, 1, 1)
    return jnp.maximum(y, 0.0)


if __name__ == "__main__":
    # Small shapes consistent with ConvBlock(in_channels=4, out_channels=8)
    N, Cin, H, W = 2, 4, 16, 16
    Cout = 8

    key = jax.random.PRNGKey(0)
    kx, kw, kg, kb = jax.random.split(key, 4)
    x = jax.random.normal(kx, (N, Cin, H, W), dtype=jnp.float32)
    conv_weight = jax.random.normal(kw, (Cout, Cin, 3, 3), dtype=jnp.float32) * 0.1
    bn_gamma = 1.0 + 0.1 * jax.random.normal(kg, (Cout,), dtype=jnp.float32)
    bn_beta = 0.1 * jax.random.normal(kb, (Cout,), dtype=jnp.float32)

    out = jax.block_until_ready(conv_block_forward(x, conv_weight, bn_gamma, bn_beta))
    ref = jax.block_until_ready(_reference_forward(x, conv_weight, bn_gamma, bn_beta))

    assert out.shape == (N, Cout, H, W)
    assert out.dtype == jnp.float32
    max_err = float(jnp.max(jnp.abs(out - ref)))
    assert jnp.allclose(out, ref, atol=1e-3, rtol=1e-3), f"mismatch vs reference, max_err={max_err}"

    print("KERNEL_OK")
</pallas_src>

<mosaic_0001>
module attributes {stable_mosaic.version = 11 : i64} {
  func.func @_conv_stats_kernel(%arg0: i32, %arg1: memref<1x18x18x4xbf16, #tpu.memory_space<vmem>>, %arg2: memref<3x3x4x128xbf16, #tpu.memory_space<vmem>>, %arg3: memref<1x256x128xf32, #tpu.memory_space<vmem>>, %arg4: memref<1x128xf32, #tpu.memory_space<vmem>>, %arg5: memref<1x128xf32, #tpu.memory_space<vmem>>) attributes {dimension_semantics = [#tpu.dimension_semantics<arbitrary>], iteration_bounds = array<i64: 2>, scalar_prefetch = 0 : i64, scratch_operands = 0 : i64, tpu.core_type = #tpu.core_type<tc>, window_params = [{transform_indices = @transform_0, window_bounds = array<i64: 1, 18, 18, 4>}, {pipeline_mode = #tpu.pipeline_mode<synchronous>, transform_indices = @transform_1, window_bounds = array<i64: 3, 3, 4, 128>}, {transform_indices = @transform_2, window_bounds = array<i64: 1, 256, 128>}, {pipeline_mode = #tpu.pipeline_mode<synchronous>, transform_indices = @transform_3, window_bounds = array<i64: 1, 128>}, {pipeline_mode = #tpu.pipeline_mode<synchronous>, transform_indices = @transform_4, window_bounds = array<i64: 1, 128>}]} {
    %c0_i32 = arith.constant 0 : i32
    %0 = arith.cmpi eq, %arg0, %c0_i32 : i32
    %1 = arith.extui %0 : i1 to i32
    %c0_i32_0 = arith.constant 0 : i32
    %2 = arith.cmpi ne, %1, %c0_i32_0 : i32
    scf.if %2 {
      %cst_60 = arith.constant 0.000000e+00 : f32
      %74 = vector.broadcast %cst_60 : f32 to vector<1x128xf32>
      %c0_61 = arith.constant 0 : index
      %c0_62 = arith.constant 0 : index
      %75 = vector.load %arg4[%c0_61, %c0_62] : memref<1x128xf32, #tpu.memory_space<vmem>>, vector<1x128xf32>
      tpu.vector_store %arg4[%c0_61, %c0_62], %74 {strides = array<i32>} : memref<1x128xf32, #tpu.memory_space<vmem>>, vector<1x128xf32>,
      %cst_63 = arith.constant 0.000000e+00 : f32
      %76 = vector.broadcast %cst_63 : f32 to vector<1x128xf32>
      %c0_64 = arith.constant 0 : index
      %c0_65 = arith.constant 0 : index
      %77 = vector.load %arg5[%c0_64, %c0_65] : memref<1x128xf32, #tpu.memory_space<vmem>>, vector<1x128xf32>
      tpu.vector_store %arg5[%c0_64, %c0_65], %76 {strides = array<i32>} : memref<1x128xf32, #tpu.memory_space<vmem>>, vector<1x128xf32>,
    } else {
    }
    %c0 = arith.constant 0 : index
    %c0_1 = arith.constant 0 : index
    %c0_2 = arith.constant 0 : index
    %c0_3 = arith.constant 0 : index
    %3 = vector.load %arg1[%c0, %c0_1, %c0_2, %c0_3] : memref<1x18x18x4xbf16, #tpu.memory_space<vmem>>, vector<1x18x18x4xbf16>
    %4 = vector.shape_cast %3 : vector<1x18x18x4xbf16> to vector<18x18x4xbf16>
    %cst = arith.constant 0.000000e+00 : f32
    %5 = vector.broadcast %cst : f32 to vector<256x128xf32>
    %6 = vector.extract_strided_slice %4 {offsets = [0, 0, 0], sizes = [16, 16, 4], strides = [1, 1, 1]} : vector<18x18x4xbf16> to vector<16x16x4xbf16>
    %7 = vector.shape_cast %6 : vector<16x16x4xbf16> to vector<256x4xbf16>
    %c0_4 = arith.constant 0 : index
    %c0_5 = arith.constant 0 : index
    %c0_6 = arith.constant 0 : index
    %c0_7 = arith.constant 0 : index
    %8 = vector.load %arg2[%c0_4, %c0_5, %c0_6, %c0_7] : memref<3x3x4x128xbf16, #tpu.memory_space<vmem>>, vector<1x1x4x128xbf16>
    %9 = vector.shape_cast %8 : vector<1x1x4x128xbf16> to vector<4x128xbf16>
    %cst_8 = arith.constant dense<0.000000e+00> : vector<256x128xf32>
    %10 = tpu.matmul %7, %9, %cst_8 {dimension_numbers = #tpu.dot_dimension_numbers<[1], [0], [0], [1], [0, 0, 1, 1], [], []>} : vector<256x4xbf16>, vector<4x128xbf16>, vector<256x128xf32> -> vector<256x128xf32>
    %11 = arith.addf %5, %10 : vector<256x128xf32>
    %12 = vector.extract_strided_slice %4 {offsets = [0, 1, 0], sizes = [16, 16, 4], strides = [1, 1, 1]} : vector<18x18x4xbf16> to vector<16x16x4xbf16>
    %13 = vector.shape_cast %12 : vector<16x16x4xbf16> to vector<256x4xbf16>
    %c0_9 = arith.constant 0 : index
    %c1 = arith.constant 1 : index
    %c0_10 = arith.constant 0 : index
    %c0_11 = arith.constant 0 : index
    %14 = vector.load %arg2[%c0_9, %c1, %c0_10, %c0_11] : memref<3x3x4x128xbf16, #tpu.memory_space<vmem>>, vector<1x1x4x128xbf16>
    %15 = vector.shape_cast %14 : vector<1x1x4x128xbf16> to vector<4x128xbf16>
    %cst_12 = arith.constant dense<0.000000e+00> : vector<256x128xf32>
    %16 = tpu.matmul %13, %15, %cst_12 {dimension_numbers = #tpu.dot_dimension_numbers<[1], [0], [0], [1], [0, 0, 1, 1], [], []>} : vector<256x4xbf16>, vector<4x128xbf16>, vector<256x128xf32> -> vector<256x128xf32>
    %17 = arith.addf %11, %16 : vector<256x128xf32>
    %18 = vector.extract_strided_slice %4 {offsets = [0, 2, 0], sizes = [16, 16, 4], strides = [1, 1, 1]} : vector<18x18x4xbf16> to vector<16x16x4xbf16>
    %19 = vector.shape_cast %18 : vector<16x16x4xbf16> to vector<256x4xbf16>
    %c0_13 = arith.constant 0 : index
    %c2 = arith.constant 2 : index
    %c0_14 = arith.constant 0 : index
    %c0_15 = arith.constant 0 : index
    %20 = vector.load %arg2[%c0_13, %c2, %c0_14, %c0_15] : memref<3x3x4x128xbf16, #tpu.memory_space<vmem>>, vector<1x1x4x128xbf16>
    %21 = vector.shape_cast %20 : vector<1x1x4x128xbf16> to vector<4x128xbf16>
    %cst_16 = arith.constant dense<0.000000e+00> : vector<256x128xf32>
    %22 = tpu.matmul %19, %21, %cst_16 {dimension_numbers = #tpu.dot_dimension_numbers<[1], [0], [0], [1], [0, 0, 1, 1], [], []>} : vector<256x4xbf16>, vector<4x128xbf16>, vector<256x128xf32> -> vector<256x128xf32>
    %23 = arith.addf %17, %22 : vector<256x128xf32>
    %24 = vector.extract_strided_slice %4 {offsets = [1, 0, 0], sizes = [16, 16, 4], strides = [1, 1, 1]} : vector<18x18x4xbf16> to vector<16x16x4xbf16>
    %25 = vector.shape_cast %24 : vector<16x16x4xbf16> to vector<256x4xbf16>
    %c1_17 = arith.constant 1 : index
    %c0_18 = arith.constant 0 : index
    %c0_19 = arith.constant 0 : index
    %c0_20 = arith.constant 0 : index
    %26 = vector.load %arg2[%c1_17, %c0_18, %c0_19, %c0_20] : memref<3x3x4x128xbf16, #tpu.memory_space<vmem>>, vector<1x1x4x128xbf16>
    %27 = vector.shape_cast %26 : vector<1x1x4x128xbf16> to vector<4x128xbf16>
    %cst_21 = arith.constant dense<0.000000e+00> : vector<256x128xf32>
    %28 = tpu.matmul %25, %27, %cst_21 {dimension_numbers = #tpu.dot_dimension_numbers<[1], [0], [0], [1], [0, 0, 1, 1], [], []>} : vector<256x4xbf16>, vector<4x128xbf16>, vector<256x128xf32> -> vector<256x128xf32>
    %29 = arith.addf %23, %28 : vector<256x128xf32>
    %30 = vector.extract_strided_slice %4 {offsets = [1, 1, 0], sizes = [16, 16, 4], strides = [1, 1, 1]} : vector<18x18x4xbf16> to vector<16x16x4xbf16>
    %31 = vector.shape_cast %30 : vector<16x16x4xbf16> to vector<256x4xbf16>
    %c1_22 = arith.constant 1 : index
    %c1_23 = arith.constant 1 : index
    %c0_24 = arith.constant 0 : index
    %c0_25 = arith.constant 0 : index
    %32 = vector.load %arg2[%c1_22, %c1_23, %c0_24, %c0_25] : memref<3x3x4x128xbf16, #tpu.memory_space<vmem>>, vector<1x1x4x128xbf16>
    %33 = vector.shape_cast %32 : vector<1x1x4x128xbf16> to vector<4x128xbf16>
    %cst_26 = arith.constant dense<0.000000e+00> : vector<256x128xf32>
    %34 = tpu.matmul %31, %33, %cst_26 {dimension_numbers = #tpu.dot_dimension_numbers<[1], [0], [0], [1], [0, 0, 1, 1], [], []>} : vector<256x4xbf16>, vector<4x128xbf16>, vector<256x128xf32> -> vector<256x128xf32>
    %35 = arith.addf %29, %34 : vector<256x128xf32>
    %36 = vector.extract_strided_slice %4 {offsets = [1, 2, 0], sizes = [16, 16, 4], strides = [1, 1, 1]} : vector<18x18x4xbf16> to vector<16x16x4xbf16>
    %37 = vector.shape_cast %36 : vector<16x16x4xbf16> to vector<256x4xbf16>
    %c1_27 = arith.constant 1 : index
    %c2_28 = arith.constant 2 : index
    %c0_29 = arith.constant 0 : index
    %c0_30 = arith.constant 0 : index
    %38 = vector.load %arg2[%c1_27, %c2_28, %c0_29, %c0_30] : memref<3x3x4x128xbf16, #tpu.memory_space<vmem>>, vector<1x1x4x128xbf16>
    %39 = vector.shape_cast %38 : vector<1x1x4x128xbf16> to vector<4x128xbf16>
    %cst_31 = arith.constant dense<0.000000e+00> : vector<256x128xf32>
    %40 = tpu.matmul %37, %39, %cst_31 {dimension_numbers = #tpu.dot_dimension_numbers<[1], [0], [0], [1], [0, 0, 1, 1], [], []>} : vector<256x4xbf16>, vector<4x128xbf16>, vector<256x128xf32> -> vector<256x128xf32>
    %41 = arith.addf %35, %40 : vector<256x128xf32>
    %42 = vector.extract_strided_slice %4 {offsets = [2, 0, 0], sizes = [16, 16, 4], strides = [1, 1, 1]} : vector<18x18x4xbf16> to vector<16x16x4xbf16>
    %43 = vector.shape_cast %42 : vector<16x16x4xbf16> to vector<256x4xbf16>
    %c2_32 = arith.constant 2 : index
    %c0_33 = arith.constant 0 : index
    %c0_34 = arith.constant 0 : index
    %c0_35 = arith.constant 0 : index
    %44 = vector.load %arg2[%c2_32, %c0_33, %c0_34, %c0_35] : memref<3x3x4x128xbf16, #tpu.memory_space<vmem>>, vector<1x1x4x128xbf16>
    %45 = vector.shape_cast %44 : vector<1x1x4x128xbf16> to vector<4x128xbf16>
    %cst_36 = arith.constant dense<0.000000e+00> : vector<256x128xf32>
    %46 = tpu.matmul %43, %45, %cst_36 {dimension_numbers = #tpu.dot_dimension_numbers<[1], [0], [0], [1], [0, 0, 1, 1], [], []>} : vector<256x4xbf16>, vector<4x128xbf16>, vector<256x128xf32> -> vector<256x128xf32>
    %47 = arith.addf %41, %46 : vector<256x128xf32>
    %48 = vector.extract_strided_slice %4 {offsets = [2, 1, 0], sizes = [16, 16, 4], strides = [1, 1, 1]} : vector<18x18x4xbf16> to vector<16x16x4xbf16>
    %49 = vector.shape_cast %48 : vector<16x16x4xbf16> to vector<256x4xbf16>
    %c2_37 = arith.constant 2 : index
    %c1_38 = arith.constant 1 : index
    %c0_39 = arith.constant 0 : index
    %c0_40 = arith.constant 0 : index
    %50 = vector.load %arg2[%c2_37, %c1_38, %c0_39, %c0_40] : memref<3x3x4x128xbf16, #tpu.memory_space<vmem>>, vector<1x1x4x128xbf16>
    %51 = vector.shape_cast %50 : vector<1x1x4x128xbf16> to vector<4x128xbf16>
    %cst_41 = arith.constant dense<0.000000e+00> : vector<256x128xf32>
    %52 = tpu.matmul %49, %51, %cst_41 {dimension_numbers = #tpu.dot_dimension_numbers<[1], [0], [0], [1], [0, 0, 1, 1], [], []>} : vector<256x4xbf16>, vector<4x128xbf16>, vector<256x128xf32> -> vector<256x128xf32>
    %53 = arith.addf %47, %52 : vector<256x128xf32>
    %54 = vector.extract_strided_slice %4 {offsets = [2, 2, 0], sizes = [16, 16, 4], strides = [1, 1, 1]} : vector<18x18x4xbf16> to vector<16x16x4xbf16>
    %55 = vector.shape_cast %54 : vector<16x16x4xbf16> to vector<256x4xbf16>
    %c2_42 = arith.constant 2 : index
    %c2_43 = arith.constant 2 : index
    %c0_44 = arith.constant 0 : index
    %c0_45 = arith.constant 0 : index
    %56 = vector.load %arg2[%c2_42, %c2_43, %c0_44, %c0_45] : memref<3x3x4x128xbf16, #tpu.memory_space<vmem>>, vector<1x1x4x128xbf16>
    %57 = vector.shape_cast %56 : vector<1x1x4x128xbf16> to vector<4x128xbf16>
    %cst_46 = arith.constant dense<0.000000e+00> : vector<256x128xf32>
    %58 = tpu.matmul %55, %57, %cst_46 {dimension_numbers = #tpu.dot_dimension_numbers<[1], [0], [0], [1], [0, 0, 1, 1], [], []>} : vector<256x4xbf16>, vector<4x128xbf16>, vector<256x128xf32> -> vector<256x128xf32>
    %59 = arith.addf %53, %58 : vector<256x128xf32>
    %c0_47 = arith.constant 0 : index
    %c0_48 = arith.constant 0 : index
    %c0_49 = arith.constant 0 : index
    %60 = vector.load %arg3[%c0_47, %c0_48, %c0_49] : memref<1x256x128xf32, #tpu.memory_space<vmem>>, vector<1x256x128xf32>
    %61 = vector.shape_cast %60 : vector<1x256x128xf32> to vector<256x128xf32>
    %62 = vector.shape_cast %59 : vector<256x128xf32> to vector<1x256x128xf32>
    tpu.vector_store %arg3[%c0_47, %c0_48, %c0_49], %62 {strides = array<i32>} : memref<1x256x128xf32, #tpu.memory_space<vmem>>, vector<1x256x128xf32>,
    %c0_50 = arith.constant 0 : index
    %c0_51 = arith.constant 0 : index
    %63 = vector.load %arg4[%c0_50, %c0_51] : memref<1x128xf32, #tpu.memory_space<vmem>>, vector<1x128xf32>
    %cst_52 = arith.constant dense<0.000000e+00> : vector<128xf32>
    %64 = vector.multi_reduction <add>, %59, %cst_52 [0] : vector<256x128xf32> to vector<128xf32>
    %65 = vector.shape_cast %64 : vector<128xf32> to vector<1x128xf32>
    %66 = arith.addf %63, %65 : vector<1x128xf32>
    %c0_53 = arith.constant 0 : index
    %c0_54 = arith.constant 0 : index
    %67 = vector.load %arg4[%c0_53, %c0_54] : memref<1x128xf32, #tpu.memory_space<vmem>>, vector<1x128xf32>
    tpu.vector_store %arg4[%c0_53, %c0_54], %66 {strides = array<i32>} : memref<1x128xf32, #tpu.memory_space<vmem>>, vector<1x128xf32>,
    %c0_55 = arith.constant 0 : index
    %c0_56 = arith.constant 0 : index
    %68 = vector.load %arg5[%c0_55, %c0_56] : memref<1x128xf32, #tpu.memory_space<vmem>>, vector<1x128xf32>
    %69 = arith.mulf %59, %59 : vector<256x128xf32>
    %cst_57 = arith.constant dense<0.000000e+00> : vector<128xf32>
    %70 = vector.multi_reduction <add>, %69, %cst_57 [0] : vector<256x128xf32> to vector<128xf32>
    %71 = vector.shape_cast %70 : vector<128xf32> to vector<1x128xf32>
    %72 = arith.addf %68, %71 : vector<1x128xf32>
    %c0_58 = arith.constant 0 : index
    %c0_59 = arith.constant 0 : index
    %73 = vector.load %arg5[%c0_58, %c0_59] : memref<1x128xf32, #tpu.memory_space<vmem>>, vector<1x128xf32>
    tpu.vector_store %arg5[%c0_58, %c0_59], %72 {strides = array<i32>} : memref<1x128xf32, #tpu.memory_space<vmem>>, vector<1x128xf32>,
    return
  }
  func.func @transform_0(%arg0: i32) -> (i32, i32, i32, i32) {
    %c0_i32 = arith.constant 0 : i32
    %c0_i32_0 = arith.constant 0 : i32
    %c0_i32_1 = arith.constant 0 : i32
    %c0_i32_2 = arith.constant 0 : i32
    return %arg0, %c0_i32, %c0_i32_0, %c0_i32_1 : i32, i32, i32, i32
  }
  func.func @transform_1(%arg0: i32) -> (i32, i32, i32, i32) {
    %c0_i32 = arith.constant 0 : i32
    %c0_i32_0 = arith.constant 0 : i32
    %c0_i32_1 = arith.constant 0 : i32
    %c0_i32_2 = arith.constant 0 : i32
    %c0_i32_3 = arith.constant 0 : i32
    return %c0_i32, %c0_i32_0, %c0_i32_1, %c0_i32_2 : i32, i32, i32, i32
  }
  func.func @transform_2(%arg0: i32) -> (i32, i32, i32) {
    %c0_i32 = arith.constant 0 : i32
    %c0_i32_0 = arith.constant 0 : i32
    %c0_i32_1 = arith.constant 0 : i32
    return %arg0, %c0_i32, %c0_i32_0 : i32, i32, i32
  }
  func.func @transform_3(%arg0: i32) -> (i32, i32) {
    %c0_i32 = arith.constant 0 : i32
    %c0_i32_0 = arith.constant 0 : i32
    %c0_i32_1 = arith.constant 0 : i32
    return %c0_i32, %c0_i32_0 : i32, i32
  }
  func.func @transform_4(%arg0: i32) -> (i32, i32) {
    %c0_i32 = arith.constant 0 : i32
    %c0_i32_0 = arith.constant 0 : i32
    %c0_i32_1 = arith.constant 0 : i32
    return %c0_i32, %c0_i32_0 : i32, i32
  }
}

</mosaic_0001>

<llo_original>
// kernel: tpu_custom_call.1
$region0: #{tpu_custom_call.1}
  #allocation0 [shape = 'u32[]', space=smem, size = 0x4, offset = 0x4, fixed_abs, tag = 'smem constant byte address 0x4 - core index']
  #allocation1 [shape = 'u32[144,128]{1,0:T(1,128)}', space=vmem, size = 0x12000, scoped, tag = 'internal scratch']
  %s0 = inlined_call_operand.vmem [shape: bf16[2,18,18,4], index: 0, kind: input, shape index: {}]
  %s1 = inlined_call_operand.vmem [shape: bf16[3,3,4,128], index: 1, kind: input, shape index: {}]
  %s2 = inlined_call_operand.hbm [shape: f32[2,256,128], index: 2, kind: output, shape index: {0}]
  %s3 = inlined_call_operand.hbm [shape: f32[1,128], index: 3, kind: output, shape index: {1}]
  %s4 = inlined_call_operand.hbm [shape: f32[1,128], index: 4, kind: output, shape index: {2}]
  %5 = xla_tuple %s2, %s3, %s4
  %s6 = sld [smem:[#allocation0]]
  $region61: #{tpu_custom_call.1} parent=0
    _
  %s8 = ssub.s32 1, %s6
  %s9 = scalar_select 0, %s8, %s6
  $region1: #{tpu_custom_call.1} parent=0
    #allocation2 [shape = 'u8[262144]{0}', space=vmem, size = 0x40000, scoped, tag = 'output window, operand 0']
    #allocation3 [shape = 's32[2]{0}', space=sflag, size = 0x8, scoped, tag = 'scoped memory for tpu_custom_call.1']
    #allocation4 [shape = 'u8[512]{0}', space=vmem, size = 0x400, scoped, tag = 'output window, operand 1, single buffered']
    #allocation5 [shape = 's32[1]{0}', space=sflag, size = 0x4, scoped, tag = 'scoped memory for tpu_custom_call.1']
    #allocation6 [shape = 'u8[512]{0}', space=vmem, size = 0x400, scoped, tag = 'output window, operand 2, single buffered']
    %10 = vsyncpa [#allocation3], 0
    %s11 = scalar_lea.sflag [#allocation3], 1
    %12 = vsyncpa %s11, 0
    %13 = vsyncpa [#allocation5], 0
    loop: start=0, step=1, limit=4
    $region2: #{tpu_custom_call.1} parent=1 // loop_pre_header
      _
    $region3: #{tpu_custom_call.1} parent=1 // loop_header
      %s15 = sphi 0, %s19
      %p16 = scmp.ge.s32.totalorder %s15, 4
      %s25 = sphi 0, %s27
      %s28 = sphi 0, %s25
      %s29 = sphi 0, %s28
      %s45 = sphi 0, %s29
      %s49 = sphi 0, %s49
      %s51 = sphi 0, %s49
      %s52 = sphi 0, %s51
      %s66 = sphi 0, %s52
      %s72 = sphi 0, %s74
      %s75 = sphi 0, %s72
      %s76 = sphi 0, %s75
      %s92 = sphi 0, %s76
      %s96 = sphi 0, %s96
      %s98 = sphi 0, %s96
      %s99 = sphi 0, %s98
      %s113 = sphi 0, %s99
      %s117 = sphi 0, %s117
      %s119 = sphi 0, %s117
      %s120 = sphi 0, %s119
      %s134 = sphi 0, %s120
    $region4: #{tpu_custom_call.1} parent=1 // loop_header_branch
      %18 = sbr.rel (%p16) target = $region8
    $region5: #{tpu_custom_call.1} parent=1 // loop_body
      %s20 = ssub.s32 %s15, 1
      %s21 = ssub.s32 %s15, 2
      %s22 = sadd.s32 %s15, 1
      %s23 = ssub.s32 %s15, %s22
      %p24 = scmp.eq.s32.totalorder %s23, 0
      %s26 = sadd.s32 %s25, 1
      %s27 = scalar_select %p24, %s25, %s26
      %p30 = pneg %p24
      %p31 = scmp.eq.s32.totalorder %s15, 1
      %p32 = por %p30, %p31
      %p33 = scmp.ne.s32.totalorder %s25, %s28
      %p34 = scmp.eq.s32.totalorder %s15, 0
      %p35 = por %p33, %p34
      %p36 = scmp.ne.s32.totalorder %s25, %s28
      %p37 = scmp.eq.s32.totalorder %s20, 1
      %p38 = por %p36, %p37
      %p39 = scmp.ne.s32.totalorder %s28, %s29
      %p40 = scmp.eq.s32.totalorder %s20, 0
      %p41 = por %p39, %p40
      %p42 = scmp.ne.s32.totalorder %s28, %s29
      %p43 = scmp.eq.s32.totalorder %s21, 1
      %p44 = por %p42, %p43
      %p46 = scmp.ne.s32.totalorder %s29, %s45
      %p47 = scmp.eq.s32.totalorder %s21, 0
      %p48 = por %p46, %p47
      %s50 = sadd.s32 %s49, 1
      %p53 = scmp.eq.s32.totalorder %s15, 1
      %p54 = scmp.ne.s32.totalorder %s49, %s51
      %p55 = scmp.eq.s32.totalorder %s15, 0
      %p56 = por %p54, %p55
      %p57 = scmp.ne.s32.totalorder %s49, %s51
      %p58 = scmp.eq.s32.totalorder %s20, 1
      %p59 = por %p57, %p58
      %p60 = scmp.ne.s32.totalorder %s51, %s52
      %p61 = scmp.eq.s32.totalorder %s20, 0
      %p62 = por %p60, %p61
      %p63 = scmp.ne.s32.totalorder %s51, %s52
      %p64 = scmp.eq.s32.totalorder %s21, 1
      %p65 = por %p63, %p64
      %p67 = scmp.ne.s32.totalorder %s52, %s66
      %p68 = scmp.eq.s32.totalorder %s21, 0
      %p69 = por %p67, %p68
      %s70 = ssub.s32 %s15, %s22
      %p71 = scmp.eq.s32.totalorder %s70, 0
      %s73 = sadd.s32 %s72, 1
      %s74 = scalar_select %p71, %s72, %s73
      %p77 = pneg %p71
      %p78 = scmp.eq.s32.totalorder %s15, 1
      %p79 = por %p77, %p78
      %p80 = scmp.ne.s32.totalorder %s72, %s75
      %p81 = scmp.eq.s32.totalorder %s15, 0
      %p82 = por %p80, %p81
      %p83 = scmp.ne.s32.totalorder %s72, %s75
      %p84 = scmp.eq.s32.totalorder %s20, 1
      %p85 = por %p83, %p84
      %p86 = scmp.ne.s32.totalorder %s75, %s76
      %p87 = scmp.eq.s32.totalorder %s20, 0
      %p88 = por %p86, %p87
      %p89 = scmp.ne.s32.totalorder %s75, %s76
      %p90 = scmp.eq.s32.totalorder %s21, 1
      %p91 = por %p89, %p90
      %p93 = scmp.ne.s32.totalorder %s76, %s92
      %p94 = scmp.eq.s32.totalorder %s21, 0
      %p95 = por %p93, %p94
      %s97 = sadd.s32 %s96, 1
      %p100 = scmp.eq.s32.totalorder %s15, 1
      %p101 = scmp.ne.s32.totalorder %s96, %s98
      %p102 = scmp.eq.s32.totalorder %s15, 0
      %p103 = por %p101, %p102
      %p104 = scmp.ne.s32.totalorder %s96, %s98
      %p105 = scmp.eq.s32.totalorder %s20, 1
      %p106 = por %p104, %p105
      %p107 = scmp.ne.s32.totalorder %s98, %s99
      %p108 = scmp.eq.s32.totalorder %s20, 0
      %p109 = por %p107, %p108
      %p110 = scmp.ne.s32.totalorder %s98, %s99
      %p111 = scmp.eq.s32.totalorder %s21, 1
      %p112 = por %p110, %p111
      %p114 = scmp.ne.s32.totalorder %s99, %s113
      %p115 = scmp.eq.s32.totalorder %s21, 0
      %p116 = por %p114, %p115
      %s118 = sadd.s32 %s117, 1
      %p121 = scmp.eq.s32.totalorder %s15, 1
      %p122 = scmp.ne.s32.totalorder %s117, %s119
      %p123 = scmp.eq.s32.totalorder %s15, 0
      %p124 = por %p122, %p123
      %p125 = scmp.ne.s32.totalorder %s117, %s119
      %p126 = scmp.eq.s32.totalorder %s20, 1
      %p127 = por %p125, %p126
      %p128 = scmp.ne.s32.totalorder %s119, %s120
      %p129 = scmp.eq.s32.totalorder %s20, 0
      %p130 = por %p128, %p129
      %p131 = scmp.ne.s32.totalorder %s119, %s120
      %p132 = scmp.eq.s32.totalorder %s21, 1
      %p133 = por %p131, %p132
      %p135 = scmp.ne.s32.totalorder %s120, %s134
      %p136 = scmp.eq.s32.totalorder %s21, 0
      %p137 = por %p135, %p136
      %p138 = scmp.le.s32.totalorder 1, %s15
      %p139 = scmp.lt.s32.totalorder %s15, 3
      %p140 = pnand %p138, %p139
      %p141 = pneg %p140
      // Predicated region
      $region9: #{tpu_custom_call.1} parent=5 // pred_check
        _
      $region10: #{tpu_custom_call.1} parent=5 // pred_check_branch
        %143 = sbr.rel (%p140) target = $region12
      $region11: #{tpu_custom_call.1} parent=5 // pred_region
        %s144 = ssub.s32 %s15, 1
        // Predicated region
        $region13: #{tpu_custom_call.1} parent=11 // pred_check
          %p145 = pneg %p62
        $region14: #{tpu_custom_call.1} parent=11 // pred_check_branch
          %147 = sbr.rel (%p145) target = $region16
        $region15: #{tpu_custom_call.1} parent=11 // pred_region
          _
        $region16: #{tpu_custom_call.1} parent=11 // pred_fallthru
          _
      $region12: #{tpu_custom_call.1} parent=5 // pred_fallthru
        _
      %p148 = scmp.lt.s32.totalorder %s15, 2
      // Predicated region
      $region17: #{tpu_custom_call.1} parent=5 // pred_check
        %p149 = pneg %p148
      $region18: #{tpu_custom_call.1} parent=5 // pred_check_branch
        %151 = sbr.rel (%p149) target = $region20
      $region19: #{tpu_custom_call.1} parent=5 // pred_region
        // Predicated region
        $region21: #{tpu_custom_call.1} parent=19 // pred_check
          %p152 = pneg %p35
        $region22: #{tpu_custom_call.1} parent=19 // pred_check_branch
          %154 = sbr.rel (%p152) target = $region24
        $region23: #{tpu_custom_call.1} parent=19 // pred_region
          %p155 = scmp.lt.s32.totalorder %s15, 1
          %s156 = scalar_select %p155, %s15, 1
          %s157 = smul.addr %s156, 54
          %s158 = smul.addr %s157, 4
          %s159 = scalar_lea.vmem %s0, %s158
        $region24: #{tpu_custom_call.1} parent=19 // pred_fallthru
          _
      $region20: #{tpu_custom_call.1} parent=5 // pred_fallthru
        _
      %p160 = scmp.le.s32.totalorder 1, %s15
      %p161 = scmp.lt.s32.totalorder %s15, 3
      %p162 = pnand %p160, %p161
      %p163 = pneg %p162
      // Predicated region
      $region25: #{tpu_custom_call.1} parent=5 // pred_check
        _
      $region26: #{tpu_custom_call.1} parent=5 // pred_check_branch
        %165 = sbr.rel (%p162) target = $region28
      $region27: #{tpu_custom_call.1} parent=5 // pred_region
        %s166 = ssub.s32 %s15, 1
        %p167 = scmp.lt.s32.totalorder %s20, 1
        %s168 = scalar_select %p167, %s20, 1
        %s169 = smul.addr %s168, 54
        %s170 = smul.addr %s169, 4
        %s171 = scalar_lea.vmem %s0, %s170
        %p172 = pneg %p41
        %p173 = pneg %p38
        %p174 = pneg %p62
        %p175 = pneg %p59
        %p176 = pneg %p88
        %p177 = pneg %p85
        %s178 = sand.u32 %s75, 1
        %s179 = scalar_lea.sflag [#allocation3], %s178
        %s180 = sand.u32 %s75, 1
        %s181 = smul.addr %s180, 256
        %s182 = scalar_lea.vmem [#allocation2], %s181
        %p183 = pneg %p109
        %p184 = pneg %p106
        %p185 = pneg %p130
        %p186 = pneg %p127
        %p187 = scmp.lt.s32.totalorder %s20, 1
        %s188 = scalar_select %p187, %s20, 1
        %s189 = smul.addr %s188, 54
        %s190 = smul.addr %s189, 4
        %s191 = scalar_lea.vmem %s0, %s190
        %p193 = scmp.eq.s32.totalorder %s20, 0
        // Predicated region
        $region29: #{tpu_custom_call.1} parent=27 // pred_check
          %p194 = pneg %p193
        $region30: #{tpu_custom_call.1} parent=27 // pred_check_branch
          %196 = sbr.rel (%p194) target = $region32
        $region31: #{tpu_custom_call.1} parent=27 // pred_region
          %197 = vst [vmem:[#allocation4] sm:$0x1] 0.0
          %198 = vst [vmem:[#allocation6] sm:$0x1] 0.0
        $region32: #{tpu_custom_call.1} parent=27 // pred_fallthru
          _
        %v199 = vld [vmem:[%s191] sm:$0xf]
        %v200 = vld [vmem:[%s191 + $0x4] sm:$0xf]
        %v201 = vld [vmem:[%s191 + $0x8] sm:$0x1]
        %v202 = vld [vmem:[%s191 + $0xc] sm:$0xf]
        %v203 = vld [vmem:[%s191 + $0x10] sm:$0xf]
        %v204 = vld [vmem:[%s191 + $0x14] sm:$0x1]
        %v205 = vld [vmem:[%s191 + $0x18] sm:$0xf]
        %v206 = vld [vmem:[%s191 + $0x1c] sm:$0xf]
        %v207 = vld [vmem:[%s191 + $0x20] sm:$0x1]
        %v208 = vld [vmem:[%s191 + $0x24] sm:$0xf]
        %v209 = vld [vmem:[%s191 + $0x28] sm:$0xf]
        %v210 = vld [vmem:[%s191 + $0x2c] sm:$0x1]
        %v211 = vld [vmem:[%s191 + $0x30] sm:$0xf]
        %v212 = vld [vmem:[%s191 + $0x34] sm:$0xf]
        %v213 = vld [vmem:[%s191 + $0x38] sm:$0x1]
        %v214 = vld [vmem:[%s191 + $0x3c] sm:$0xf]
        %v215 = vld [vmem:[%s191 + $0x40] sm:$0xf]
        %v216 = vld [vmem:[%s191 + $0x44] sm:$0x1]
        %v217 = vld [vmem:[%s191 + $0x48] sm:$0xf]
        %v218 = vld [vmem:[%s191 + $0x4c] sm:$0xf]
        %v219 = vld [vmem:[%s191 + $0x50] sm:$0x1]
        %v220 = vld [vmem:[%s191 + $0x54] sm:$0xf]
        %v221 = vld [vmem:[%s191 + $0x58] sm:$0xf]
        %v222 = vld [vmem:[%s191 + $0x5c] sm:$0x1]
        %v223 = vld [vmem:[%s191 + $0x60] sm:$0xf]
        %v224 = vld [vmem:[%s191 + $0x64] sm:$0xf]
        %v225 = vld [vmem:[%s191 + $0x68] sm:$0x1]
        %v226 = vld [vmem:[%s191 + $0x6c] sm:$0xf]
        %v227 = vld [vmem:[%s191 + $0x70] sm:$0xf]
        %v228 = vld [vmem:[%s191 + $0x74] sm:$0x1]
        %v229 = vld [vmem:[%s191 + $0x78] sm:$0xf]
        %v230 = vld [vmem:[%s191 + $0x7c] sm:$0xf]
        %v231 = vld [vmem:[%s191 + $0x80] sm:$0x1]
        %v232 = vld [vmem:[%s191 + $0x84] sm:$0xf]
        %v233 = vld [vmem:[%s191 + $0x88] sm:$0xf]
        %v234 = vld [vmem:[%s191 + $0x8c] sm:$0x1]
        %v235 = vld [vmem:[%s191 + $0x90] sm:$0xf]
        %v236 = vld [vmem:[%s191 + $0x94] sm:$0xf]
        %v237 = vld [vmem:[%s191 + $0x98] sm:$0x1]
        %v238 = vld [vmem:[%s191 + $0x9c] sm:$0xf]
        %v239 = vld [vmem:[%s191 + $0xa0] sm:$0xf]
        %v240 = vld [vmem:[%s191 + $0xa4] sm:$0x1]
        %v241 = vld [vmem:[%s191 + $0xa8] sm:$0xf]
        %v242 = vld [vmem:[%s191 + $0xac] sm:$0xf]
        %v243 = vld [vmem:[%s191 + $0xb0] sm:$0x1]
        %v244 = vld [vmem:[%s191 + $0xb4] sm:$0xf]
        %v245 = vld [vmem:[%s191 + $0xb8] sm:$0xf]
        %v246 = vld [vmem:[%s191 + $0xbc] sm:$0x1]
        %v247 = vld [vmem:[%s191 + $0xc0] sm:$0xf]
        %v248 = vld [vmem:[%s191 + $0xc4] sm:$0xf]
        %v249 = vld [vmem:[%s191 + $0xc8] sm:$0x1]
        %v250 = vld [vmem:[%s191 + $0xcc] sm:$0xf]
        %v251 = vld [vmem:[%s191 + $0xd0] sm:$0xf]
        %v252 = vld [vmem:[%s191 + $0xd4] sm:$0x1]
        %v253 = vld [vmem:[%s1] sm:$0x3]
        %vm254 = vsmask.f32 3328
        %vm255 = vsmask.f32 7440
        %vm256 = vmor %vm254, %vm255
        %v258 = vshrl.u32 %v199, 16
        %v260 = vrot.slane %v258, 4
        %v261 = vshll.u32 %v199, 16
        %v263 = vrot.slane %v261, 5
        %v264 = vor.u32 %v260, %v263
        %v265 = vrot.slane %v264, 4
        %v267 = vshll.u32 %v200, 16
        %v269 = vrot.slane %v267, 5
        %v270 = vsel %vm256, %v265, %v269
        %v271 = vshrl.u32 %v200, 16
        %v273 = vrot.slane %v271, 4
        %v274 = vor.u32 %v273, %v269
        %v275 = vrot.slane %v274, 4
        %v277 = vshll.u32 %v201, 16
        %v279 = vrot.slane %v277, 5
        %v280 = vsel %vm256, %v275, %v279
        %v282 = vshrl.u32 %v202, 16
        %v284 = vrot.slane %v282, 4
        %v285 = vshll.u32 %v202, 16
        %v287 = vrot.slane %v285, 5
        %v288 = vor.u32 %v284, %v287
        %v289 = vrot.slane %v288, 4
        %v291 = vshll.u32 %v203, 16
        %v293 = vrot.slane %v291, 5
        %v294 = vsel %vm256, %v289, %v293
        %v295 = vshrl.u32 %v203, 16
        %v297 = vrot.slane %v295, 4
        %v298 = vor.u32 %v297, %v293
        %v299 = vrot.slane %v298, 4
        %v301 = vshll.u32 %v204, 16
        %v303 = vrot.slane %v301, 5
        %v304 = vsel %vm256, %v299, %v303
        %v306 = vshrl.u32 %v205, 16
        %v308 = vrot.slane %v306, 4
        %v309 = vshll.u32 %v205, 16
        %v311 = vrot.slane %v309, 5
        %v312 = vor.u32 %v308, %v311
        %v313 = vrot.slane %v312, 4
        %v315 = vshll.u32 %v206, 16
        %v317 = vrot.slane %v315, 5
        %v318 = vsel %vm256, %v313, %v317
        %v319 = vshrl.u32 %v206, 16
        %v321 = vrot.slane %v319, 4
        %v322 = vor.u32 %v321, %v317
        %v323 = vrot.slane %v322, 4
        %v325 = vshll.u32 %v207, 16
        %v327 = vrot.slane %v325, 5
        %v328 = vsel %vm256, %v323, %v327
        %v330 = vshrl.u32 %v208, 16
        %v332 = vrot.slane %v330, 4
        %v333 = vshll.u32 %v208, 16
        %v335 = vrot.slane %v333, 5
        %v336 = vor.u32 %v332, %v335
        %v337 = vrot.slane %v336, 4
        %v339 = vshll.u32 %v209, 16
        %v341 = vrot.slane %v339, 5
        %v342 = vsel %vm256, %v337, %v341
        %v343 = vshrl.u32 %v209, 16
        %v345 = vrot.slane %v343, 4
        %v346 = vor.u32 %v345, %v341
        %v347 = vrot.slane %v346, 4
        %v349 = vshll.u32 %v210, 16
        %v351 = vrot.slane %v349, 5
        %v352 = vsel %vm256, %v347, %v351
        %v354 = vshrl.u32 %v211, 16
        %v356 = vrot.slane %v354, 4
        %v357 = vshll.u32 %v211, 16
        %v359 = vrot.slane %v357, 5
        %v360 = vor.u32 %v356, %v359
        %v361 = vrot.slane %v360, 4
        %v363 = vshll.u32 %v212, 16
        %v365 = vrot.slane %v363, 5
        %v366 = vsel %vm256, %v361, %v365
        %v367 = vshrl.u32 %v212, 16
        %v369 = vrot.slane %v367, 4
        %v370 = vor.u32 %v369, %v365
        %v371 = vrot.slane %v370, 4
        %v373 = vshll.u32 %v213, 16
        %v375 = vrot.slane %v373, 5
        %v376 = vsel %vm256, %v371, %v375
        %v378 = vshrl.u32 %v214, 16
        %v380 = vrot.slane %v378, 4
        %v381 = vshll.u32 %v214, 16
        %v383 = vrot.slane %v381, 5
        %v384 = vor.u32 %v380, %v383
        %v385 = vrot.slane %v384, 4
        %v387 = vshll.u32 %v215, 16
        %v389 = vrot.slane %v387, 5
        %v390 = vsel %vm256, %v385, %v389
        %v391 = vshrl.u32 %v215, 16
        %v393 = vrot.slane %v391, 4
        %v394 = vor.u32 %v393, %v389
        %v395 = vrot.slane %v394, 4
        %v397 = vshll.u32 %v216, 16
        %v399 = vrot.slane %v397, 5
        %v400 = vsel %vm256, %v395, %v399
        %v402 = vshrl.u32 %v217, 16
        %v404 = vrot.slane %v402, 4
        %v405 = vshll.u32 %v217, 16
        %v407 = vrot.slane %v405, 5
        %v408 = vor.u32 %v404, %v407
        %v409 = vrot.slane %v408, 4
        %v411 = vshll.u32 %v218, 16
        %v413 = vrot.slane %v411, 5
        %v414 = vsel %vm256, %v409, %v413
        %v415 = vshrl.u32 %v218, 16
        %v417 = vrot.slane %v415, 4
        %v418 = vor.u32 %v417, %v413
        %v419 = vrot.slane %v418, 4
        %v421 = vshll.u32 %v219, 16
        %v423 = vrot.slane %v421, 5
        %v424 = vsel %vm256, %v419, %v423
        %v426 = vshrl.u32 %v220, 16
        %v428 = vrot.slane %v426, 4
        %v429 = vshll.u32 %v220, 16
        %v431 = vrot.slane %v429, 5
        %v432 = vor.u32 %v428, %v431
        %v433 = vrot.slane %v432, 4
        %v435 = vshll.u32 %v221, 16
        %v437 = vrot.slane %v435, 5
        %v438 = vsel %vm256, %v433, %v437
        %v439 = vshrl.u32 %v221, 16
        %v441 = vrot.slane %v439, 4
        %v442 = vor.u32 %v441, %v437
        %v443 = vrot.slane %v442, 4
        %v445 = vshll.u32 %v222, 16
        %v447 = vrot.slane %v445, 5
        %v448 = vsel %vm256, %v443, %v447
        %v450 = vshrl.u32 %v223, 16
        %v452 = vrot.slane %v450, 4
        %v453 = vshll.u32 %v223, 16
        %v455 = vrot.slane %v453, 5
        %v456 = vor.u32 %v452, %v455
        %v457 = vrot.slane %v456, 4
        %v459 = vshll.u32 %v224, 16
        %v461 = vrot.slane %v459, 5
        %v462 = vsel %vm256, %v457, %v461
        %v463 = vshrl.u32 %v224, 16
        %v465 = vrot.slane %v463, 4
        %v466 = vor.u32 %v465, %v461
        %v467 = vrot.slane %v466, 4
        %v469 = vshll.u32 %v225, 16
        %v471 = vrot.slane %v469, 5
        %v472 = vsel %vm256, %v467, %v471
        %v474 = vshrl.u32 %v226, 16
        %v476 = vrot.slane %v474, 4
        %v477 = vshll.u32 %v226, 16
        %v479 = vrot.slane %v477, 5
        %v480 = vor.u32 %v476, %v479
        %v481 = vrot.slane %v480, 4
        %v483 = vshll.u32 %v227, 16
        %v485 = vrot.slane %v483, 5
        %v486 = vsel %vm256, %v481, %v485
        %v487 = vshrl.u32 %v227, 16
        %v489 = vrot.slane %v487, 4
        %v490 = vor.u32 %v489, %v485
        %v491 = vrot.slane %v490, 4
        %v493 = vshll.u32 %v228, 16
        %v495 = vrot.slane %v493, 5
        %v496 = vsel %vm256, %v491, %v495
        %v498 = vshrl.u32 %v229, 16
        %v500 = vrot.slane %v498, 4
        %v501 = vshll.u32 %v229, 16
        %v503 = vrot.slane %v501, 5
        %v504 = vor.u32 %v500, %v503
        %v505 = vrot.slane %v504, 4
        %v507 = vshll.u32 %v230, 16
        %v509 = vrot.slane %v507, 5
        %v510 = vsel %vm256, %v505, %v509
        %v511 = vshrl.u32 %v230, 16
        %v513 = vrot.slane %v511, 4
        %v514 = vor.u32 %v513, %v509
        %v515 = vrot.slane %v514, 4
        %v517 = vshll.u32 %v231, 16
        %v519 = vrot.slane %v517, 5
        %v520 = vsel %vm256, %v515, %v519
        %v522 = vshrl.u32 %v232, 16
        %v524 = vrot.slane %v522, 4
        %v525 = vshll.u32 %v232, 16
        %v527 = vrot.slane %v525, 5
        %v528 = vor.u32 %v524, %v527
        %v529 = vrot.slane %v528, 4
        %v531 = vshll.u32 %v233, 16
        %v533 = vrot.slane %v531, 5
        %v534 = vsel %vm256, %v529, %v533
        %v535 = vshrl.u32 %v233, 16
        %v537 = vrot.slane %v535, 4
        %v538 = vor.u32 %v537, %v533
        %v539 = vrot.slane %v538, 4
        %v541 = vshll.u32 %v234, 16
        %v543 = vrot.slane %v541, 5
        %v544 = vsel %vm256, %v539, %v543
        %v546 = vshrl.u32 %v235, 16
        %v548 = vrot.slane %v546, 4
        %v549 = vshll.u32 %v235, 16
        %v551 = vrot.slane %v549, 5
        %v552 = vor.u32 %v548, %v551
        %v553 = vrot.slane %v552, 4
        %v555 = vshll.u32 %v236, 16
        %v557 = vrot.slane %v555, 5
        %v558 = vsel %vm256, %v553, %v557
        %v559 = vshrl.u32 %v236, 16
        %v561 = vrot.slane %v559, 4
        %v562 = vor.u32 %v561, %v557
        %v563 = vrot.slane %v562, 4
        %v565 = vshll.u32 %v237, 16
        %v567 = vrot.slane %v565, 5
        %v568 = vsel %vm256, %v563, %v567
        %v570 = vshrl.u32 %v238, 16
        %v572 = vrot.slane %v570, 4
        %v573 = vshll.u32 %v238, 16
        %v575 = vrot.slane %v573, 5
        %v576 = vor.u32 %v572, %v575
        %v577 = vrot.slane %v576, 4
        %v579 = vshll.u32 %v239, 16
        %v581 = vrot.slane %v579, 5
        %v582 = vsel %vm256, %v577, %v581
        %v583 = vshrl.u32 %v239, 16
        %v585 = vrot.slane %v583, 4
        %v586 = vor.u32 %v585, %v581
        %v587 = vrot.slane %v586, 4
        %v589 = vshll.u32 %v240, 16
        %v591 = vrot.slane %v589, 5
        %v592 = vsel %vm256, %v587, %v591
        %v594 = vshrl.u32 %v241, 16
        %v596 = vrot.slane %v594, 4
        %v597 = vshll.u32 %v241, 16
        %v599 = vrot.slane %v597, 5
        %v600 = vor.u32 %v596, %v599
        %v601 = vrot.slane %v600, 4
        %v603 = vshll.u32 %v242, 16
        %v605 = vrot.slane %v603, 5
        %v606 = vsel %vm256, %v601, %v605
        %v607 = vshrl.u32 %v242, 16
        %v609 = vrot.slane %v607, 4
        %v610 = vor.u32 %v609, %v605
        %v611 = vrot.slane %v610, 4
        %v613 = vshll.u32 %v243, 16
        %v615 = vrot.slane %v613, 5
        %v616 = vsel %vm256, %v611, %v615
        %v618 = vshrl.u32 %v244, 16
        %v620 = vrot.slane %v618, 4
        %v621 = vshll.u32 %v244, 16
        %v623 = vrot.slane %v621, 5
        %v624 = vor.u32 %v620, %v623
        %v625 = vrot.slane %v624, 4
        %v627 = vshll.u32 %v245, 16
        %v629 = vrot.slane %v627, 5
        %v630 = vsel %vm256, %v625, %v629
        %v631 = vshrl.u32 %v245, 16
        %v633 = vrot.slane %v631, 4
        %v634 = vor.u32 %v633, %v629
        %v635 = vrot.slane %v634, 4
        %v637 = vshll.u32 %v246, 16
        %v639 = vrot.slane %v637, 5
        %v640 = vsel %vm256, %v635, %v639
        %s641 = scalar_lea.vmem %s1, 2
        %v642 = vld [vmem:[%s641] sm:$0x3]
        %v643 = vunpack.c.l.b16 %v270
        %v644 = vunpack.c.l.b16 %v280
        %v645 = vunpack.c.l.b16 %v294
        %v646 = vunpack.c.l.b16 %v304
        %v647 = vunpack.c.l.b16 %v318
        %v648 = vunpack.c.l.b16 %v328
        %v649 = vunpack.c.l.b16 %v342
        %v650 = vunpack.c.l.b16 %v352
        %v651 = vunpack.c.l.b16 %v366
        %v652 = vunpack.c.l.b16 %v376
        %v653 = vunpack.c.l.b16 %v390
        %v654 = vunpack.c.l.b16 %v400
        %v655 = vunpack.c.l.b16 %v414
        %v656 = vunpack.c.l.b16 %v424
        %v657 = vunpack.c.l.b16 %v438
        %v658 = vunpack.c.l.b16 %v448
        %v659 = vunpack.c.l.b16 %v462
        %v660 = vunpack.c.l.b16 %v472
        %v661 = vunpack.c.l.b16 %v486
        %v662 = vunpack.c.l.b16 %v496
        %v663 = vunpack.c.l.b16 %v510
        %v664 = vunpack.c.l.b16 %v520
        %v665 = vunpack.c.l.b16 %v534
        %v666 = vunpack.c.l.b16 %v544
        %v667 = vunpack.c.l.b16 %v558
        %v668 = vunpack.c.l.b16 %v568
        %v669 = vunpack.c.l.b16 %v582
        %v670 = vunpack.c.l.b16 %v592
        %v671 = vunpack.c.l.b16 %v606
        %v672 = vunpack.c.l.b16 %v616
        %v673 = vunpack.c.l.b16 %v630
        %v674 = vunpack.c.l.b16 %v640
        %v675 = vpack.c.b16 %v644, %v643
        %v676 = vpack.c.b16 %v646, %v645
        %v677 = vpack.c.b16 %v648, %v647
        %v678 = vpack.c.b16 %v650, %v649
        %v679 = vpack.c.b16 %v652, %v651
        %v680 = vpack.c.b16 %v654, %v653
        %v681 = vpack.c.b16 %v656, %v655
        %v682 = vpack.c.b16 %v658, %v657
        %v683 = vpack.c.b16 %v660, %v659
        %v684 = vpack.c.b16 %v662, %v661
        %v685 = vpack.c.b16 %v664, %v663
        %v686 = vpack.c.b16 %v666, %v665
        %v687 = vpack.c.b16 %v668, %v667
        %v688 = vpack.c.b16 %v670, %v669
        %v689 = vpack.c.b16 %v672, %v671
        %v690 = vpack.c.b16 %v674, %v673
        %vm691 = vcmask 31744
        %v693 = vsel %vm691, %v675, 0
        %v696 = vsel %vm691, %v676, 0
        %v699 = vsel %vm691, %v677, 0
        %v702 = vsel %vm691, %v678, 0
        %v705 = vsel %vm691, %v679, 0
        %v708 = vsel %vm691, %v680, 0
        %v711 = vsel %vm691, %v681, 0
        %v714 = vsel %vm691, %v682, 0
        %v717 = vsel %vm691, %v683, 0
        %v720 = vsel %vm691, %v684, 0
        %v723 = vsel %vm691, %v685, 0
        %v726 = vsel %vm691, %v686, 0
        %v729 = vsel %vm691, %v687, 0
        %v732 = vsel %vm691, %v688, 0
        %v735 = vsel %vm691, %v689, 0
        %v738 = vsel %vm691, %v690, 0
        %vm740 = vcmask 1041408
        %v742 = vsel %vm740, %v642, 0
        %744 = vmatprep.subr.bf16.mxu0 0
        %745 = vmatpush1.bf16.msra.mxu0 0
        %746 = vmatprep.subr.bf16.mxu0 0
        %747 = vmatpush1.bf16.msra.mxu0 0
        %748 = vmatprep.subr.bf16.mxu0 0
        %749 = vmatpush1.bf16.msra.mxu0 0
        %750 = vmatprep.subr.bf16.mxu0 0
        %751 = vmatpush1.bf16.msra.mxu0 0
        %752 = vmatprep.subr.bf16.mxu0 0
        %753 = vmatpush1.bf16.msra.mxu0 0
        %754 = vmatprep.subr.bf16.mxu0 0
        %755 = vmatpush1.bf16.msra.mxu0 0
        %756 = vmatprep.subr.bf16.mxu0 0
        %757 = vmatpush1.bf16.msra.mxu0 0
        %758 = vmatprep.subr.bf16.mxu0 0
        %759 = vmatpush1.bf16.msra.mxu0 %v742
        %760 = vmatprep.subr.bf16.mxu0 0
        %761 = vmatpush2.bf16.msra.mxu0 0
        %762 = vmatprep.subr.bf16.mxu0 0
        %763 = vmatpush2.bf16.msra.mxu0 0
        %764 = vmatprep.subr.bf16.mxu0 0
        %765 = vmatpush2.bf16.msra.mxu0 0
        %766 = vmatprep.subr.bf16.mxu0 0
        %767 = vmatpush2.bf16.msra.mxu0 0
        %768 = vmatprep.subr.bf16.mxu0 0
        %769 = vmatpush2.bf16.msra.mxu0 0
        %770 = vmatprep.subr.bf16.mxu0 0
        %771 = vmatpush2.bf16.msra.mxu0 0
        %772 = vmatprep.subr.bf16.mxu0 0
        %773 = vmatpush2.bf16.msra.mxu0 0
        %774 = vmatprep.subr.bf16.mxu0 0
        %775 = vmatpush2.bf16.msra.mxu0 0
        %776 = vmatprep.mubr.bf16.mxu0 0
        %777 = vmatmul.mubr.bf16.gmra.mxu0 %v693
        %v778 = vpop.f32.mrf.mxu0
        %v779 = vadd.f32 0.0, %v778
        %v780 = vpop.f32.mrf.mxu0
        %v781 = vpop.f32.mrf.mxu0
        %v782 = vadd.f32 0.0, %v781
        %v783 = vpop.f32.mrf.mxu0
        %784 = vmatprep.mubr.bf16.mxu0 0
        %785 = vmatmul.mubr.bf16.gmra.mxu0 %v696
        %v786 = vpop.f32.mrf.mxu0
        %v787 = vadd.f32 0.0, %v786
        %v788 = vpop.f32.mrf.mxu0
        %v789 = vpop.f32.mrf.mxu0
        %v790 = vadd.f32 0.0, %v789
        %v791 = vpop.f32.mrf.mxu0
        %792 = vmatprep.mubr.bf16.mxu0 0
        %793 = vmatmul.mubr.bf16.gmra.mxu0 %v699
        %v794 = vpop.f32.mrf.mxu0
        %v795 = vadd.f32 0.0, %v794
        %v796 = vpop.f32.mrf.mxu0
        %v797 = vpop.f32.mrf.mxu0
        %v798 = vadd.f32 0.0, %v797
        %v799 = vpop.f32.mrf.mxu0
        %800 = vmatprep.mubr.bf16.mxu0 0
        %801 = vmatmul.mubr.bf16.gmra.mxu0 %v702
        %v802 = vpop.f32.mrf.mxu0
        %v803 = vadd.f32 0.0, %v802
        %v804 = vpop.f32.mrf.mxu0
        %v805 = vpop.f32.mrf.mxu0
        %v806 = vadd.f32 0.0, %v805
        %v807 = vpop.f32.mrf.mxu0
        %808 = vmatprep.mubr.bf16.mxu0 0
        %809 = vmatmul.mubr.bf16.gmra.mxu0 %v705
        %v810 = vpop.f32.mrf.mxu0
        %v811 = vadd.f32 0.0, %v810
        %v812 = vpop.f32.mrf.mxu0
        %v813 = vpop.f32.mrf.mxu0
        %v814 = vadd.f32 0.0, %v813
        %v815 = vpop.f32.mrf.mxu0
        %816 = vmatprep.mubr.bf16.mxu0 0
        %817 = vmatmul.mubr.bf16.gmra.mxu0 %v708
        %v818 = vpop.f32.mrf.mxu0
        %v819 = vadd.f32 0.0, %v818
        %v820 = vpop.f32.mrf.mxu0
        %v821 = vpop.f32.mrf.mxu0
        %v822 = vadd.f32 0.0, %v821
        %v823 = vpop.f32.mrf.mxu0
        %824 = vmatprep.mubr.bf16.mxu0 0
        %825 = vmatmul.mubr.bf16.gmra.mxu0 %v711
        %v826 = vpop.f32.mrf.mxu0
        %v827 = vadd.f32 0.0, %v826
        %v828 = vpop.f32.mrf.mxu0
        %v829 = vpop.f32.mrf.mxu0
        %v830 = vadd.f32 0.0, %v829
        %v831 = vpop.f32.mrf.mxu0
        %832 = vmatprep.mubr.bf16.mxu0 0
        %833 = vmatmul.mubr.bf16.gmra.mxu0 %v714
        %v834 = vpop.f32.mrf.mxu0
        %v835 = vadd.f32 0.0, %v834
        %v836 = vpop.f32.mrf.mxu0
        %v837 = vpop.f32.mrf.mxu0
        %v838 = vadd.f32 0.0, %v837
        %v839 = vpop.f32.mrf.mxu0
        %840 = vmatprep.mubr.bf16.mxu0 0
        %841 = vmatmul.mubr.bf16.gmra.mxu0 %v717
        %v842 = vpop.f32.mrf.mxu0
        %v843 = vadd.f32 0.0, %v842
        %v844 = vpop.f32.mrf.mxu0
        %v845 = vpop.f32.mrf.mxu0
        %v846 = vadd.f32 0.0, %v845
        %v847 = vpop.f32.mrf.mxu0
        %848 = vmatprep.mubr.bf16.mxu0 0
        %849 = vmatmul.mubr.bf16.gmra.mxu0 %v720
        %v850 = vpop.f32.mrf.mxu0
        %v851 = vadd.f32 0.0, %v850
        %v852 = vpop.f32.mrf.mxu0
        %v853 = vpop.f32.mrf.mxu0
        %v854 = vadd.f32 0.0, %v853
        %v855 = vpop.f32.mrf.mxu0
        %856 = vmatprep.mubr.bf16.mxu0 0
        %857 = vmatmul.mubr.bf16.gmra.mxu0 %v723
        %v858 = vpop.f32.mrf.mxu0
        %v859 = vadd.f32 0.0, %v858
        %v860 = vpop.f32.mrf.mxu0
        %v861 = vpop.f32.mrf.mxu0
        %v862 = vadd.f32 0.0, %v861
        %v863 = vpop.f32.mrf.mxu0
        %864 = vmatprep.mubr.bf16.mxu0 0
        %865 = vmatmul.mubr.bf16.gmra.mxu0 %v726
        %v866 = vpop.f32.mrf.mxu0
        %v867 = vadd.f32 0.0, %v866
        %v868 = vpop.f32.mrf.mxu0
        %v869 = vpop.f32.mrf.mxu0
        %v870 = vadd.f32 0.0, %v869
        %v871 = vpop.f32.mrf.mxu0
        %872 = vmatprep.mubr.bf16.mxu0 0
        %873 = vmatmul.mubr.bf16.gmra.mxu0 %v729
        %v874 = vpop.f32.mrf.mxu0
        %v875 = vadd.f32 0.0, %v874
        %v876 = vpop.f32.mrf.mxu0
        %v877 = vpop.f32.mrf.mxu0
        %v878 = vadd.f32 0.0, %v877
        %v879 = vpop.f32.mrf.mxu0
        %880 = vmatprep.mubr.bf16.mxu0 0
        %881 = vmatmul.mubr.bf16.gmra.mxu0 %v732
        %v882 = vpop.f32.mrf.mxu0
        %v883 = vadd.f32 0.0, %v882
        %v884 = vpop.f32.mrf.mxu0
        %v885 = vpop.f32.mrf.mxu0
        %v886 = vadd.f32 0.0, %v885
        %v887 = vpop.f32.mrf.mxu0
        %888 = vmatprep.mubr.bf16.mxu0 0
        %889 = vmatmul.mubr.bf16.gmra.mxu0 %v735
        %v890 = vpop.f32.mrf.mxu0
        %v891 = vadd.f32 0.0, %v890
        %v892 = vpop.f32.mrf.mxu0
        %v893 = vpop.f32.mrf.mxu0
        %v894 = vadd.f32 0.0, %v893
        %v895 = vpop.f32.mrf.mxu0
        %896 = vmatprep.mubr.bf16.mxu0 0
        %897 = vmatmul.mubr.bf16.gmra.mxu0 %v738
        %v898 = vpop.f32.mrf.mxu0
        %v899 = vadd.f32 0.0, %v898
        %v900 = vpop.f32.mrf.mxu0
        %v901 = vpop.f32.mrf.mxu0
        %v902 = vadd.f32 0.0, %v901
        %v903 = vpop.f32.mrf.mxu0
        %904 = vdwg.mxu0
        %v937 = vunpack.c.l.b16 %v199
        %v938 = vunpack.c.l.b16 %v200
        %v939 = vunpack.c.l.b16 %v202
        %v940 = vunpack.c.l.b16 %v203
        %v941 = vunpack.c.l.b16 %v205
        %v942 = vunpack.c.l.b16 %v206
        %v943 = vunpack.c.l.b16 %v208
        %v944 = vunpack.c.l.b16 %v209
        %v945 = vunpack.c.l.b16 %v211
        %v946 = vunpack.c.l.b16 %v212
        %v947 = vunpack.c.l.b16 %v214
        %v948 = vunpack.c.l.b16 %v215
        %v949 = vunpack.c.l.b16 %v217
        %v950 = vunpack.c.l.b16 %v218
        %v951 = vunpack.c.l.b16 %v220
        %v952 = vunpack.c.l.b16 %v221
        %v953 = vunpack.c.l.b16 %v223
        %v954 = vunpack.c.l.b16 %v224
        %v955 = vunpack.c.l.b16 %v226
        %v956 = vunpack.c.l.b16 %v227
        %v957 = vunpack.c.l.b16 %v229
        %v958 = vunpack.c.l.b16 %v230
        %v959 = vunpack.c.l.b16 %v232
        %v960 = vunpack.c.l.b16 %v233
        %v961 = vunpack.c.l.b16 %v235
        %v962 = vunpack.c.l.b16 %v236
        %v963 = vunpack.c.l.b16 %v238
        %v964 = vunpack.c.l.b16 %v239
        %v965 = vunpack.c.l.b16 %v241
        %v966 = vunpack.c.l.b16 %v242
        %v967 = vunpack.c.l.b16 %v244
        %v968 = vunpack.c.l.b16 %v245
        %v969 = vpack.c.b16 %v938, %v937
        %v970 = vpack.c.b16 %v940, %v939
        %v971 = vpack.c.b16 %v942, %v941
        %v972 = vpack.c.b16 %v944, %v943
        %v973 = vpack.c.b16 %v946, %v945
        %v974 = vpack.c.b16 %v948, %v947
        %v975 = vpack.c.b16 %v950, %v949
        %v976 = vpack.c.b16 %v952, %v951
        %v977 = vpack.c.b16 %v954, %v953
        %v978 = vpack.c.b16 %v956, %v955
        %v979 = vpack.c.b16 %v958, %v957
        %v980 = vpack.c.b16 %v960, %v959
        %v981 = vpack.c.b16 %v962, %v961
        %v982 = vpack.c.b16 %v964, %v963
        %v983 = vpack.c.b16 %v966, %v965
        %v984 = vpack.c.b16 %v968, %v967
        %v986 = vsel %vm691, %v969, 0
        %v989 = vsel %vm691, %v970, 0
        %v992 = vsel %vm691, %v971, 0
        %v995 = vsel %vm691, %v972, 0
        %v998 = vsel %vm691, %v973, 0
        %v1001 = vsel %vm691, %v974, 0
        %v1004 = vsel %vm691, %v975, 0
        %v1007 = vsel %vm691, %v976, 0
        %v1010 = vsel %vm691, %v977, 0
        %v1013 = vsel %vm691, %v978, 0
        %v1016 = vsel %vm691, %v979, 0
        %v1019 = vsel %vm691, %v980, 0
        %v1022 = vsel %vm691, %v981, 0
        %v1025 = vsel %vm691, %v982, 0
        %v1028 = vsel %vm691, %v983, 0
        %v1031 = vsel %vm691, %v984, 0
        %v1034 = vsel %vm740, %v253, 0
        %1036 = vmatprep.subr.bf16.mxu0 0
        %1037 = vmatpush1.bf16.msra.mxu0 0
        %1038 = vmatprep.subr.bf16.mxu0 0
        %1039 = vmatpush1.bf16.msra.mxu0 0
        %1040 = vmatprep.subr.bf16.mxu0 0
        %1041 = vmatpush1.bf16.msra.mxu0 0
        %1042 = vmatprep.subr.bf16.mxu0 0
        %1043 = vmatpush1.bf16.msra.mxu0 0
        %1044 = vmatprep.subr.bf16.mxu0 0
        %1045 = vmatpush1.bf16.msra.mxu0 0
        %1046 = vmatprep.subr.bf16.mxu0 0
        %1047 = vmatpush1.bf16.msra.mxu0 0
        %1048 = vmatprep.subr.bf16.mxu0 0
        %1049 = vmatpush1.bf16.msra.mxu0 0
        %1050 = vmatprep.subr.bf16.mxu0 0
        %1051 = vmatpush1.bf16.msra.mxu0 %v1034
        %1052 = vmatprep.subr.bf16.mxu0 0
        %1053 = vmatpush2.bf16.msra.mxu0 0
        %1054 = vmatprep.subr.bf16.mxu0 0
        %1055 = vmatpush2.bf16.msra.mxu0 0
        %1056 = vmatprep.subr.bf16.mxu0 0
        %1057 = vmatpush2.bf16.msra.mxu0 0
        %1058 = vmatprep.subr.bf16.mxu0 0
        %1059 = vmatpush2.bf16.msra.mxu0 0
        %1060 = vmatprep.subr.bf16.mxu0 0
        %1061 = vmatpush2.bf16.msra.mxu0 0
        %1062 = vmatprep.subr.bf16.mxu0 0
        %1063 = vmatpush2.bf16.msra.mxu0 0
        %1064 = vmatprep.subr.bf16.mxu0 0
        %1065 = vmatpush2.bf16.msra.mxu0 0
        %1066 = vmatprep.subr.bf16.mxu0 0
        %1067 = vmatpush2.bf16.msra.mxu0 0
        %1068 = vmatprep.mubr.bf16.mxu0 0
        %1069 = vmatmul.mubr.bf16.gmra.mxu0 %v986
        %v1070 = vpop.f32.mrf.mxu0
        %v1071 = vadd.f32 %v779, %v1070
        %v1072 = vpop.f32.mrf.mxu0
        %v1073 = vpop.f32.mrf.mxu0
        %v1074 = vadd.f32 %v782, %v1073
        %v1075 = vpop.f32.mrf.mxu0
        %1076 = vmatprep.mubr.bf16.mxu0 0
        %1077 = vmatmul.mubr.bf16.gmra.mxu0 %v989
        %v1078 = vpop.f32.mrf.mxu0
        %v1079 = vadd.f32 %v787, %v1078
        %v1080 = vpop.f32.mrf.mxu0
        %v1081 = vpop.f32.mrf.mxu0
        %v1082 = vadd.f32 %v790, %v1081
        %v1083 = vpop.f32.mrf.mxu0
        %1084 = vmatprep.mubr.bf16.mxu0 0
        %1085 = vmatmul.mubr.bf16.gmra.mxu0 %v992
        %v1086 = vpop.f32.mrf.mxu0
        %v1087 = vadd.f32 %v795, %v1086
        %v1088 = vpop.f32.mrf.mxu0
        %v1089 = vpop.f32.mrf.mxu0
        %v1090 = vadd.f32 %v798, %v1089
        %v1091 = vpop.f32.mrf.mxu0
        %1092 = vmatprep.mubr.bf16.mxu0 0
        %1093 = vmatmul.mubr.bf16.gmra.mxu0 %v995
        %v1094 = vpop.f32.mrf.mxu0
        %v1095 = vadd.f32 %v803, %v1094
        %v1096 = vpop.f32.mrf.mxu0
        %v1097 = vpop.f32.mrf.mxu0
        %v1098 = vadd.f32 %v806, %v1097
        %v1099 = vpop.f32.mrf.mxu0
        %1100 = vmatprep.mubr.bf16.mxu0 0
        %1101 = vmatmul.mubr.bf16.gmra.mxu0 %v998
        %v1102 = vpop.f32.mrf.mxu0
        %v1103 = vadd.f32 %v811, %v1102
        %v1104 = vpop.f32.mrf.mxu0
        %v1105 = vpop.f32.mrf.mxu0
        %v1106 = vadd.f32 %v814, %v1105
        %v1107 = vpop.f32.mrf.mxu0
        %1108 = vmatprep.mubr.bf16.mxu0 0
        %1109 = vmatmul.mubr.bf16.gmra.mxu0 %v1001
        %v1110 = vpop.f32.mrf.mxu0
        %v1111 = vadd.f32 %v819, %v1110
        %v1112 = vpop.f32.mrf.mxu0
        %v1113 = vpop.f32.mrf.mxu0
        %v1114 = vadd.f32 %v822, %v1113
        %v1115 = vpop.f32.mrf.mxu0
        %1116 = vmatprep.mubr.bf16.mxu0 0
        %1117 = vmatmul.mubr.bf16.gmra.mxu0 %v1004
        %v1118 = vpop.f32.mrf.mxu0
        %v1119 = vadd.f32 %v827, %v1118
        %v1120 = vpop.f32.mrf.mxu0
        %v1121 = vpop.f32.mrf.mxu0
        %v1122 = vadd.f32 %v830, %v1121
        %v1123 = vpop.f32.mrf.mxu0
        %1124 = vmatprep.mubr.bf16.mxu0 0
        %1125 = vmatmul.mubr.bf16.gmra.mxu0 %v1007
        %v1126 = vpop.f32.mrf.mxu0
        %v1127 = vadd.f32 %v835, %v1126
        %v1128 = vpop.f32.mrf.mxu0
        %v1129 = vpop.f32.mrf.mxu0
        %v1130 = vadd.f32 %v838, %v1129
        %v1131 = vpop.f32.mrf.mxu0
        %1132 = vmatprep.mubr.bf16.mxu0 0
        %1133 = vmatmul.mubr.bf16.gmra.mxu0 %v1010
        %v1134 = vpop.f32.mrf.mxu0
        %v1135 = vadd.f32 %v843, %v1134
        %v1136 = vpop.f32.mrf.mxu0
        %v1137 = vpop.f32.mrf.mxu0
        %v1138 = vadd.f32 %v846, %v1137
        %v1139 = vpop.f32.mrf.mxu0
        %1140 = vmatprep.mubr.bf16.mxu0 0
        %1141 = vmatmul.mubr.bf16.gmra.mxu0 %v1013
        %v1142 = vpop.f32.mrf.mxu0
        %v1143 = vadd.f32 %v851, %v1142
        %v1144 = vpop.f32.mrf.mxu0
        %v1145 = vpop.f32.mrf.mxu0
        %v1146 = vadd.f32 %v854, %v1145
        %v1147 = vpop.f32.mrf.mxu0
        %1148 = vmatprep.mubr.bf16.mxu0 0
        %1149 = vmatmul.mubr.bf16.gmra.mxu0 %v1016
        %v1150 = vpop.f32.mrf.mxu0
        %v1151 = vadd.f32 %v859, %v1150
        %v1152 = vpop.f32.mrf.mxu0
        %v1153 = vpop.f32.mrf.mxu0
        %v1154 = vadd.f32 %v862, %v1153
        %v1155 = vpop.f32.mrf.mxu0
        %1156 = vmatprep.mubr.bf16.mxu0 0
        %1157 = vmatmul.mubr.bf16.gmra.mxu0 %v1019
        %v1158 = vpop.f32.mrf.mxu0
        %v1159 = vadd.f32 %v867, %v1158
        %v1160 = vpop.f32.mrf.mxu0
        %v1161 = vpop.f32.mrf.mxu0
        %v1162 = vadd.f32 %v870, %v1161
        %v1163 = vpop.f32.mrf.mxu0
        %1164 = vmatprep.mubr.bf16.mxu0 0
        %1165 = vmatmul.mubr.bf16.gmra.mxu0 %v1022
        %v1166 = vpop.f32.mrf.mxu0
        %v1167 = vadd.f32 %v875, %v1166
        %v1168 = vpop.f32.mrf.mxu0
        %v1169 = vpop.f32.mrf.mxu0
        %v1170 = vadd.f32 %v878, %v1169
        %v1171 = vpop.f32.mrf.mxu0
        %1172 = vmatprep.mubr.bf16.mxu0 0
        %1173 = vmatmul.mubr.bf16.gmra.mxu0 %v1025
        %v1174 = vpop.f32.mrf.mxu0
        %v1175 = vadd.f32 %v883, %v1174
        %v1176 = vpop.f32.mrf.mxu0
        %v1177 = vpop.f32.mrf.mxu0
        %v1178 = vadd.f32 %v886, %v1177
        %v1179 = vpop.f32.mrf.mxu0
        %1180 = vmatprep.mubr.bf16.mxu0 0
        %1181 = vmatmul.mubr.bf16.gmra.mxu0 %v1028
        %v1182 = vpop.f32.mrf.mxu0
        %v1183 = vadd.f32 %v891, %v1182
        %v1184 = vpop.f32.mrf.mxu0
        %v1185 = vpop.f32.mrf.mxu0
        %v1186 = vadd.f32 %v894, %v1185
        %v1187 = vpop.f32.mrf.mxu0
        %1188 = vmatprep.mubr.bf16.mxu0 0
        %1189 = vmatmul.mubr.bf16.gmra.mxu0 %v1031
        %v1190 = vpop.f32.mrf.mxu0
        %v1191 = vadd.f32 %v899, %v1190
        %v1192 = vpop.f32.mrf.mxu0
        %v1193 = vpop.f32.mrf.mxu0
        %v1194 = vadd.f32 %v902, %v1193
        %v1195 = vpop.f32.mrf.mxu0
        %1196 = vdwg.mxu0
        %vm1213 = vcmask 1042432
        %vm1214 = vcmask 1046532
        %vm1215 = vmor %vm1213, %vm1214
        %v1216 = vrot.slane %v199, 5
        %v1217 = vrot.slane %v1216, 4
        %v1218 = vrot.slane %v200, 5
        %v1219 = vsel %vm1215, %v1217, %v1218
        %v1220 = vrot.slane %v1218, 4
        %v1221 = vrot.slane %v201, 5
        %v1222 = vsel %vm1215, %v1220, %v1221
        %v1223 = vrot.slane %v202, 5
        %v1224 = vrot.slane %v1223, 4
        %v1225 = vrot.slane %v203, 5
        %v1226 = vsel %vm1215, %v1224, %v1225
        %v1227 = vrot.slane %v1225, 4
        %v1228 = vrot.slane %v204, 5
        %v1229 = vsel %vm1215, %v1227, %v1228
        %v1230 = vrot.slane %v205, 5
        %v1231 = vrot.slane %v1230, 4
        %v1232 = vrot.slane %v206, 5
        %v1233 = vsel %vm1215, %v1231, %v1232
        %v1234 = vrot.slane %v1232, 4
        %v1235 = vrot.slane %v207, 5
        %v1236 = vsel %vm1215, %v1234, %v1235
        %v1237 = vrot.slane %v208, 5
        %v1238 = vrot.slane %v1237, 4
        %v1239 = vrot.slane %v209, 5
        %v1240 = vsel %vm1215, %v1238, %v1239
        %v1241 = vrot.slane %v1239, 4
        %v1242 = vrot.slane %v210, 5
        %v1243 = vsel %vm1215, %v1241, %v1242
        %v1244 = vrot.slane %v211, 5
        %v1245 = vrot.slane %v1244, 4
        %v1246 = vrot.slane %v212, 5
        %v1247 = vsel %vm1215, %v1245, %v1246
        %v1248 = vrot.slane %v1246, 4
        %v1249 = vrot.slane %v213, 5
        %v1250 = vsel %vm1215, %v1248, %v1249
        %v1251 = vrot.slane %v214, 5
        %v1252 = vrot.slane %v1251, 4
        %v1253 = vrot.slane %v215, 5
        %v1254 = vsel %vm1215, %v1252, %v1253
        %v1255 = vrot.slane %v1253, 4
        %v1256 = vrot.slane %v216, 5
        %v1257 = vsel %vm1215, %v1255, %v1256
        %v1258 = vrot.slane %v217, 5
        %v1259 = vrot.slane %v1258, 4
        %v1260 = vrot.slane %v218, 5
        %v1261 = vsel %vm1215, %v1259, %v1260
        %v1262 = vrot.slane %v1260, 4
        %v1263 = vrot.slane %v219, 5
        %v1264 = vsel %vm1215, %v1262, %v1263
        %v1265 = vrot.slane %v220, 5
        %v1266 = vrot.slane %v1265, 4
        %v1267 = vrot.slane %v221, 5
        %v1268 = vsel %vm1215, %v1266, %v1267
        %v1269 = vrot.slane %v1267, 4
        %v1270 = vrot.slane %v222, 5
        %v1271 = vsel %vm1215, %v1269, %v1270
        %v1272 = vrot.slane %v223, 5
        %v1273 = vrot.slane %v1272, 4
        %v1274 = vrot.slane %v224, 5
        %v1275 = vsel %vm1215, %v1273, %v1274
        %v1276 = vrot.slane %v1274, 4
        %v1277 = vrot.slane %v225, 5
        %v1278 = vsel %vm1215, %v1276, %v1277
        %v1279 = vrot.slane %v226, 5
        %v1280 = vrot.slane %v1279, 4
        %v1281 = vrot.slane %v227, 5
        %v1282 = vsel %vm1215, %v1280, %v1281
        %v1283 = vrot.slane %v1281, 4
        %v1284 = vrot.slane %v228, 5
        %v1285 = vsel %vm1215, %v1283, %v1284
        %v1286 = vrot.slane %v229, 5
        %v1287 = vrot.slane %v1286, 4
        %v1288 = vrot.slane %v230, 5
        %v1289 = vsel %vm1215, %v1287, %v1288
        %v1290 = vrot.slane %v1288, 4
        %v1291 = vrot.slane %v231, 5
        %v1292 = vsel %vm1215, %v1290, %v1291
        %v1293 = vrot.slane %v232, 5
        %v1294 = vrot.slane %v1293, 4
        %v1295 = vrot.slane %v233, 5
        %v1296 = vsel %vm1215, %v1294, %v1295
        %v1297 = vrot.slane %v1295, 4
        %v1298 = vrot.slane %v234, 5
        %v1299 = vsel %vm1215, %v1297, %v1298
        %v1300 = vrot.slane %v235, 5
        %v1301 = vrot.slane %v1300, 4
        %v1302 = vrot.slane %v236, 5
        %v1303 = vsel %vm1215, %v1301, %v1302
        %v1304 = vrot.slane %v1302, 4
        %v1305 = vrot.slane %v237, 5
        %v1306 = vsel %vm1215, %v1304, %v1305
        %v1307 = vrot.slane %v238, 5
        %v1308 = vrot.slane %v1307, 4
        %v1309 = vrot.slane %v239, 5
        %v1310 = vsel %vm1215, %v1308, %v1309
        %v1311 = vrot.slane %v1309, 4
        %v1312 = vrot.slane %v240, 5
        %v1313 = vsel %vm1215, %v1311, %v1312
        %v1314 = vrot.slane %v241, 5
        %v1315 = vrot.slane %v1314, 4
        %v1316 = vrot.slane %v242, 5
        %v1317 = vsel %vm1215, %v1315, %v1316
        %v1318 = vrot.slane %v1316, 4
        %v1319 = vrot.slane %v243, 5
        %v1320 = vsel %vm1215, %v1318, %v1319
        %v1321 = vrot.slane %v244, 5
        %v1322 = vrot.slane %v1321, 4
        %v1323 = vrot.slane %v245, 5
        %v1324 = vsel %vm1215, %v1322, %v1323
        %v1325 = vrot.slane %v1323, 4
        %v1326 = vrot.slane %v246, 5
        %v1327 = vsel %vm1215, %v1325, %v1326
        %s1328 = scalar_lea.vmem %s1, 4
        %v1329 = vld [vmem:[%s1328] sm:$0x3]
        %v1330 = vunpack.c.l.b16 %v1219
        %v1331 = vunpack.c.l.b16 %v1222
        %v1332 = vunpack.c.l.b16 %v1226
        %v1333 = vunpack.c.l.b16 %v1229
        %v1334 = vunpack.c.l.b16 %v1233
        %v1335 = vunpack.c.l.b16 %v1236
        %v1336 = vunpack.c.l.b16 %v1240
        %v1337 = vunpack.c.l.b16 %v1243
        %v1338 = vunpack.c.l.b16 %v1247
        %v1339 = vunpack.c.l.b16 %v1250
        %v1340 = vunpack.c.l.b16 %v1254
        %v1341 = vunpack.c.l.b16 %v1257
        %v1342 = vunpack.c.l.b16 %v1261
        %v1343 = vunpack.c.l.b16 %v1264
        %v1344 = vunpack.c.l.b16 %v1268
        %v1345 = vunpack.c.l.b16 %v1271
        %v1346 = vunpack.c.l.b16 %v1275
        %v1347 = vunpack.c.l.b16 %v1278
        %v1348 = vunpack.c.l.b16 %v1282
        %v1349 = vunpack.c.l.b16 %v1285
        %v1350 = vunpack.c.l.b16 %v1289
        %v1351 = vunpack.c.l.b16 %v1292
        %v1352 = vunpack.c.l.b16 %v1296
        %v1353 = vunpack.c.l.b16 %v1299
        %v1354 = vunpack.c.l.b16 %v1303
        %v1355 = vunpack.c.l.b16 %v1306
        %v1356 = vunpack.c.l.b16 %v1310
        %v1357 = vunpack.c.l.b16 %v1313
        %v1358 = vunpack.c.l.b16 %v1317
        %v1359 = vunpack.c.l.b16 %v1320
        %v1360 = vunpack.c.l.b16 %v1324
        %v1361 = vunpack.c.l.b16 %v1327
        %v1362 = vpack.c.b16 %v1331, %v1330
        %v1363 = vpack.c.b16 %v1333, %v1332
        %v1364 = vpack.c.b16 %v1335, %v1334
        %v1365 = vpack.c.b16 %v1337, %v1336
        %v1366 = vpack.c.b16 %v1339, %v1338
        %v1367 = vpack.c.b16 %v1341, %v1340
        %v1368 = vpack.c.b16 %v1343, %v1342
        %v1369 = vpack.c.b16 %v1345, %v1344
        %v1370 = vpack.c.b16 %v1347, %v1346
        %v1371 = vpack.c.b16 %v1349, %v1348
        %v1372 = vpack.c.b16 %v1351, %v1350
        %v1373 = vpack.c.b16 %v1353, %v1352
        %v1374 = vpack.c.b16 %v1355, %v1354
        %v1375 = vpack.c.b16 %v1357, %v1356
        %v1376 = vpack.c.b16 %v1359, %v1358
        %v1377 = vpack.c.b16 %v1361, %v1360
        %v1379 = vsel %vm691, %v1362, 0
        %v1382 = vsel %vm691, %v1363, 0
        %v1385 = vsel %vm691, %v1364, 0
        %v1388 = vsel %vm691, %v1365, 0
        %v1391 = vsel %vm691, %v1366, 0
        %v1394 = vsel %vm691, %v1367, 0
        %v1397 = vsel %vm691, %v1368, 0
        %v1400 = vsel %vm691, %v1369, 0
        %v1403 = vsel %vm691, %v1370, 0
        %v1406 = vsel %vm691, %v1371, 0
        %v1409 = vsel %vm691, %v1372, 0
        %v1412 = vsel %vm691, %v1373, 0
        %v1415 = vsel %vm691, %v1374, 0
        %v1418 = vsel %vm691, %v1375, 0
        %v1421 = vsel %vm691, %v1376, 0
        %v1424 = vsel %vm691, %v1377, 0
        %v1427 = vsel %vm740, %v1329, 0
        %1429 = vmatprep.subr.bf16.mxu0 0
        %1430 = vmatpush1.bf16.msra.mxu0 0
        %1431 = vmatprep.subr.bf16.mxu0 0
        %1432 = vmatpush1.bf16.msra.mxu0 0
        %1433 = vmatprep.subr.bf16.mxu0 0
        %1434 = vmatpush1.bf16.msra.mxu0 0
        %1435 = vmatprep.subr.bf16.mxu0 0
        %1436 = vmatpush1.bf16.msra.mxu0 0
        %1437 = vmatprep.subr.bf16.mxu0 0
        %1438 = vmatpush1.bf16.msra.mxu0 0
        %1439 = vmatprep.subr.bf16.mxu0 0
        %1440 = vmatpush1.bf16.msra.mxu0 0
        %1441 = vmatprep.subr.bf16.mxu0 0
        %1442 = vmatpush1.bf16.msra.mxu0 0
        %1443 = vmatprep.subr.bf16.mxu0 0
        %1444 = vmatpush1.bf16.msra.mxu0 %v1427
        %1445 = vmatprep.subr.bf16.mxu0 0
        %1446 = vmatpush2.bf16.msra.mxu0 0
        %1447 = vmatprep.subr.bf16.mxu0 0
        %1448 = vmatpush2.bf16.msra.mxu0 0
        %1449 = vmatprep.subr.bf16.mxu0 0
        %1450 = vmatpush2.bf16.msra.mxu0 0
        %1451 = vmatprep.subr.bf16.mxu0 0
        %1452 = vmatpush2.bf16.msra.mxu0 0
        %1453 = vmatprep.subr.bf16.mxu0 0
        %1454 = vmatpush2.bf16.msra.mxu0 0
        %1455 = vmatprep.subr.bf16.mxu0 0
        %1456 = vmatpush2.bf16.msra.mxu0 0
        %1457 = vmatprep.subr.bf16.mxu0 0
        %1458 = vmatpush2.bf16.msra.mxu0 0
        %1459 = vmatprep.subr.bf16.mxu0 0
        %1460 = vmatpush2.bf16.msra.mxu0 0
        %1461 = vmatprep.mubr.bf16.mxu0 0
        %1462 = vmatmul.mubr.bf16.gmra.mxu0 %v1379
        %v1463 = vpop.f32.mrf.mxu0
        %v1464 = vadd.f32 0.0, %v1463
        %v1465 = vpop.f32.mrf.mxu0
        %v1466 = vpop.f32.mrf.mxu0
        %v1467 = vadd.f32 0.0, %v1466
        %v1468 = vpop.f32.mrf.mxu0
        %1469 = vmatprep.mubr.bf16.mxu0 0
        %1470 = vmatmul.mubr.bf16.gmra.mxu0 %v1382
        %v1471 = vpop.f32.mrf.mxu0
        %v1472 = vadd.f32 0.0, %v1471
        %v1473 = vpop.f32.mrf.mxu0
        %v1474 = vpop.f32.mrf.mxu0
        %v1475 = vadd.f32 0.0, %v1474
        %v1476 = vpop.f32.mrf.mxu0
        %1477 = vmatprep.mubr.bf16.mxu0 0
        %1478 = vmatmul.mubr.bf16.gmra.mxu0 %v1385
        %v1479 = vpop.f32.mrf.mxu0
        %v1480 = vadd.f32 0.0, %v1479
        %v1481 = vpop.f32.mrf.mxu0
        %v1482 = vpop.f32.mrf.mxu0
        %v1483 = vadd.f32 0.0, %v1482
        %v1484 = vpop.f32.mrf.mxu0
        %1485 = vmatprep.mubr.bf16.mxu0 0
        %1486 = vmatmul.mubr.bf16.gmra.mxu0 %v1388
        %v1487 = vpop.f32.mrf.mxu0
        %v1488 = vadd.f32 0.0, %v1487
        %v1489 = vpop.f32.mrf.mxu0
        %v1490 = vpop.f32.mrf.mxu0
        %v1491 = vadd.f32 0.0, %v1490
        %v1492 = vpop.f32.mrf.mxu0
        %1493 = vmatprep.mubr.bf16.mxu0 0
        %1494 = vmatmul.mubr.bf16.gmra.mxu0 %v1391
        %v1495 = vpop.f32.mrf.mxu0
        %v1496 = vadd.f32 0.0, %v1495
        %v1497 = vpop.f32.mrf.mxu0
        %v1498 = vpop.f32.mrf.mxu0
        %v1499 = vadd.f32 0.0, %v1498
        %v1500 = vpop.f32.mrf.mxu0
        %1501 = vmatprep.mubr.bf16.mxu0 0
        %1502 = vmatmul.mubr.bf16.gmra.mxu0 %v1394
        %v1503 = vpop.f32.mrf.mxu0
        %v1504 = vadd.f32 0.0, %v1503
        %v1505 = vpop.f32.mrf.mxu0
        %v1506 = vpop.f32.mrf.mxu0
        %v1507 = vadd.f32 0.0, %v1506
        %v1508 = vpop.f32.mrf.mxu0
        %1509 = vmatprep.mubr.bf16.mxu0 0
        %1510 = vmatmul.mubr.bf16.gmra.mxu0 %v1397
        %v1511 = vpop.f32.mrf.mxu0
        %v1512 = vadd.f32 0.0, %v1511
        %v1513 = vpop.f32.mrf.mxu0
        %v1514 = vpop.f32.mrf.mxu0
        %v1515 = vadd.f32 0.0, %v1514
        %v1516 = vpop.f32.mrf.mxu0
        %1517 = vmatprep.mubr.bf16.mxu0 0
        %1518 = vmatmul.mubr.bf16.gmra.mxu0 %v1400
        %v1519 = vpop.f32.mrf.mxu0
        %v1520 = vadd.f32 0.0, %v1519
        %v1521 = vpop.f32.mrf.mxu0
        %v1522 = vpop.f32.mrf.mxu0
        %v1523 = vadd.f32 0.0, %v1522
        %v1524 = vpop.f32.mrf.mxu0
        %1525 = vmatprep.mubr.bf16.mxu0 0
        %1526 = vmatmul.mubr.bf16.gmra.mxu0 %v1403
        %v1527 = vpop.f32.mrf.mxu0
        %v1528 = vadd.f32 0.0, %v1527
        %v1529 = vpop.f32.mrf.mxu0
        %v1530 = vpop.f32.mrf.mxu0
        %v1531 = vadd.f32 0.0, %v1530
        %v1532 = vpop.f32.mrf.mxu0
        %1533 = vmatprep.mubr.bf16.mxu0 0
        %1534 = vmatmul.mubr.bf16.gmra.mxu0 %v1406
        %v1535 = vpop.f32.mrf.mxu0
        %v1536 = vadd.f32 0.0, %v1535
        %v1537 = vpop.f32.mrf.mxu0
        %v1538 = vpop.f32.mrf.mxu0
        %v1539 = vadd.f32 0.0, %v1538
        %v1540 = vpop.f32.mrf.mxu0
        %1541 = vmatprep.mubr.bf16.mxu0 0
        %1542 = vmatmul.mubr.bf16.gmra.mxu0 %v1409
        %v1543 = vpop.f32.mrf.mxu0
        %v1544 = vadd.f32 0.0, %v1543
        %v1545 = vpop.f32.mrf.mxu0
        %v1546 = vpop.f32.mrf.mxu0
        %v1547 = vadd.f32 0.0, %v1546
        %v1548 = vpop.f32.mrf.mxu0
        %1549 = vmatprep.mubr.bf16.mxu0 0
        %1550 = vmatmul.mubr.bf16.gmra.mxu0 %v1412
        %v1551 = vpop.f32.mrf.mxu0
        %v1552 = vadd.f32 0.0, %v1551
        %v1553 = vpop.f32.mrf.mxu0
        %v1554 = vpop.f32.mrf.mxu0
        %v1555 = vadd.f32 0.0, %v1554
        %v1556 = vpop.f32.mrf.mxu0
        %1557 = vmatprep.mubr.bf16.mxu0 0
        %1558 = vmatmul.mubr.bf16.gmra.mxu0 %v1415
        %v1559 = vpop.f32.mrf.mxu0
        %v1560 = vadd.f32 0.0, %v1559
        %v1561 = vpop.f32.mrf.mxu0
        %v1562 = vpop.f32.mrf.mxu0
        %v1563 = vadd.f32 0.0, %v1562
        %v1564 = vpop.f32.mrf.mxu0
        %1565 = vmatprep.mubr.bf16.mxu0 0
        %1566 = vmatmul.mubr.bf16.gmra.mxu0 %v1418
        %v1567 = vpop.f32.mrf.mxu0
        %v1568 = vadd.f32 0.0, %v1567
        %v1569 = vpop.f32.mrf.mxu0
        %v1570 = vpop.f32.mrf.mxu0
        %v1571 = vadd.f32 0.0, %v1570
        %v1572 = vpop.f32.mrf.mxu0
        %1573 = vmatprep.mubr.bf16.mxu0 0
        %1574 = vmatmul.mubr.bf16.gmra.mxu0 %v1421
        %v1575 = vpop.f32.mrf.mxu0
        %v1576 = vadd.f32 0.0, %v1575
        %v1577 = vpop.f32.mrf.mxu0
        %v1578 = vpop.f32.mrf.mxu0
        %v1579 = vadd.f32 0.0, %v1578
        %v1580 = vpop.f32.mrf.mxu0
        %1581 = vmatprep.mubr.bf16.mxu0 0
        %1582 = vmatmul.mubr.bf16.gmra.mxu0 %v1424
        %v1583 = vpop.f32.mrf.mxu0
        %v1584 = vadd.f32 0.0, %v1583
        %v1585 = vpop.f32.mrf.mxu0
        %v1586 = vpop.f32.mrf.mxu0
        %v1587 = vadd.f32 0.0, %v1586
        %v1588 = vpop.f32.mrf.mxu0
        %1589 = vdwg.mxu0
        %v1590 = vadd.f32 %v1071, %v1464
        %v1591 = vadd.f32 %v1074, %v1467
        %v1592 = vadd.f32 %v1079, %v1472
        %v1593 = vadd.f32 %v1082, %v1475
        %v1594 = vadd.f32 %v1087, %v1480
        %v1595 = vadd.f32 %v1090, %v1483
        %v1596 = vadd.f32 %v1095, %v1488
        %v1597 = vadd.f32 %v1098, %v1491
        %v1598 = vadd.f32 %v1103, %v1496
        %v1599 = vadd.f32 %v1106, %v1499
        %v1600 = vadd.f32 %v1111, %v1504
        %v1601 = vadd.f32 %v1114, %v1507
        %v1602 = vadd.f32 %v1119, %v1512
        %v1603 = vadd.f32 %v1122, %v1515
        %v1604 = vadd.f32 %v1127, %v1520
        %v1605 = vadd.f32 %v1130, %v1523
        %v1606 = vadd.f32 %v1135, %v1528
        %v1607 = vadd.f32 %v1138, %v1531
        %v1608 = vadd.f32 %v1143, %v1536
        %v1609 = vadd.f32 %v1146, %v1539
        %v1610 = vadd.f32 %v1151, %v1544
        %v1611 = vadd.f32 %v1154, %v1547
        %v1612 = vadd.f32 %v1159, %v1552
        %v1613 = vadd.f32 %v1162, %v1555
        %v1614 = vadd.f32 %v1167, %v1560
        %v1615 = vadd.f32 %v1170, %v1563
        %v1616 = vadd.f32 %v1175, %v1568
        %v1617 = vadd.f32 %v1178, %v1571
        %v1618 = vadd.f32 %v1183, %v1576
        %v1619 = vadd.f32 %v1186, %v1579
        %v1620 = vadd.f32 %v1191, %v1584
        %v1621 = vadd.f32 %v1194, %v1587
        %s1622 = scalar_lea.vmem %s1, 6
        %v1623 = vld [vmem:[%s1622] sm:$0x3]
        %v1626 = vunpack.c.l.b16 %v247
        %v1627 = vunpack.c.l.b16 %v248
        %v1628 = vpack.c.b16 %v1627, %v1626
        %v1630 = vsel %vm691, %v1628, 0
        %v1633 = vsel %vm740, %v1623, 0
        %1635 = vmatprep.subr.bf16.mxu0 0
        %1636 = vmatpush1.bf16.msra.mxu0 0
        %1637 = vmatprep.subr.bf16.mxu0 0
        %1638 = vmatpush1.bf16.msra.mxu0 0
        %1639 = vmatprep.subr.bf16.mxu0 0
        %1640 = vmatpush1.bf16.msra.mxu0 0
        %1641 = vmatprep.subr.bf16.mxu0 0
        %1642 = vmatpush1.bf16.msra.mxu0 0
        %1643 = vmatprep.subr.bf16.mxu0 0
        %1644 = vmatpush1.bf16.msra.mxu0 0
        %1645 = vmatprep.subr.bf16.mxu0 0
        %1646 = vmatpush1.bf16.msra.mxu0 0
        %1647 = vmatprep.subr.bf16.mxu0 0
        %1648 = vmatpush1.bf16.msra.mxu0 0
        %1649 = vmatprep.subr.bf16.mxu0 0
        %1650 = vmatpush1.bf16.msra.mxu0 %v1633
        %1651 = vmatprep.subr.bf16.mxu0 0
        %1652 = vmatpush2.bf16.msra.mxu0 0
        %1653 = vmatprep.subr.bf16.mxu0 0
        %1654 = vmatpush2.bf16.msra.mxu0 0
        %1655 = vmatprep.subr.bf16.mxu0 0
        %1656 = vmatpush2.bf16.msra.mxu0 0
        %1657 = vmatprep.subr.bf16.mxu0 0
        %1658 = vmatpush2.bf16.msra.mxu0 0
        %1659 = vmatprep.subr.bf16.mxu0 0
        %1660 = vmatpush2.bf16.msra.mxu0 0
        %1661 = vmatprep.subr.bf16.mxu0 0
        %1662 = vmatpush2.bf16.msra.mxu0 0
        %1663 = vmatprep.subr.bf16.mxu0 0
        %1664 = vmatpush2.bf16.msra.mxu0 0
        %1665 = vmatprep.subr.bf16.mxu0 0
        %1666 = vmatpush2.bf16.msra.mxu0 0
        %1667 = vmatprep.mubr.bf16.mxu0 0
        %1668 = vmatmul.mubr.bf16.gmra.mxu0 %v989
        %v1669 = vpop.f32.mrf.mxu0
        %v1670 = vadd.f32 0.0, %v1669
        %v1671 = vpop.f32.mrf.mxu0
        %v1672 = vpop.f32.mrf.mxu0
        %v1673 = vadd.f32 0.0, %v1672
        %v1674 = vpop.f32.mrf.mxu0
        %1675 = vmatprep.mubr.bf16.mxu0 0
        %1676 = vmatmul.mubr.bf16.gmra.mxu0 %v992
        %v1677 = vpop.f32.mrf.mxu0
        %v1678 = vadd.f32 0.0, %v1677
        %v1679 = vpop.f32.mrf.mxu0
        %v1680 = vpop.f32.mrf.mxu0
        %v1681 = vadd.f32 0.0, %v1680
        %v1682 = vpop.f32.mrf.mxu0
        %1683 = vmatprep.mubr.bf16.mxu0 0
        %1684 = vmatmul.mubr.bf16.gmra.mxu0 %v995
        %v1685 = vpop.f32.mrf.mxu0
        %v1686 = vadd.f32 0.0, %v1685
        %v1687 = vpop.f32.mrf.mxu0
        %v1688 = vpop.f32.mrf.mxu0
        %v1689 = vadd.f32 0.0, %v1688
        %v1690 = vpop.f32.mrf.mxu0
        %1691 = vmatprep.mubr.bf16.mxu0 0
        %1692 = vmatmul.mubr.bf16.gmra.mxu0 %v998
        %v1693 = vpop.f32.mrf.mxu0
        %v1694 = vadd.f32 0.0, %v1693
        %v1695 = vpop.f32.mrf.mxu0
        %v1696 = vpop.f32.mrf.mxu0
        %v1697 = vadd.f32 0.0, %v1696
        %v1698 = vpop.f32.mrf.mxu0
        %1699 = vmatprep.mubr.bf16.mxu0 0
        %1700 = vmatmul.mubr.bf16.gmra.mxu0 %v1001
        %v1701 = vpop.f32.mrf.mxu0
        %v1702 = vadd.f32 0.0, %v1701
        %v1703 = vpop.f32.mrf.mxu0
        %v1704 = vpop.f32.mrf.mxu0
        %v1705 = vadd.f32 0.0, %v1704
        %v1706 = vpop.f32.mrf.mxu0
        %1707 = vmatprep.mubr.bf16.mxu0 0
        %1708 = vmatmul.mubr.bf16.gmra.mxu0 %v1004
        %v1709 = vpop.f32.mrf.mxu0
        %v1710 = vadd.f32 0.0, %v1709
        %v1711 = vpop.f32.mrf.mxu0
        %v1712 = vpop.f32.mrf.mxu0
        %v1713 = vadd.f32 0.0, %v1712
        %v1714 = vpop.f32.mrf.mxu0
        %1715 = vmatprep.mubr.bf16.mxu0 0
        %1716 = vmatmul.mubr.bf16.gmra.mxu0 %v1007
        %v1717 = vpop.f32.mrf.mxu0
        %v1718 = vadd.f32 0.0, %v1717
        %v1719 = vpop.f32.mrf.mxu0
        %v1720 = vpop.f32.mrf.mxu0
        %v1721 = vadd.f32 0.0, %v1720
        %v1722 = vpop.f32.mrf.mxu0
        %1723 = vmatprep.mubr.bf16.mxu0 0
        %1724 = vmatmul.mubr.bf16.gmra.mxu0 %v1010
        %v1725 = vpop.f32.mrf.mxu0
        %v1726 = vadd.f32 0.0, %v1725
        %v1727 = vpop.f32.mrf.mxu0
        %v1728 = vpop.f32.mrf.mxu0
        %v1729 = vadd.f32 0.0, %v1728
        %v1730 = vpop.f32.mrf.mxu0
        %1731 = vmatprep.mubr.bf16.mxu0 0
        %1732 = vmatmul.mubr.bf16.gmra.mxu0 %v1013
        %v1733 = vpop.f32.mrf.mxu0
        %v1734 = vadd.f32 0.0, %v1733
        %v1735 = vpop.f32.mrf.mxu0
        %v1736 = vpop.f32.mrf.mxu0
        %v1737 = vadd.f32 0.0, %v1736
        %v1738 = vpop.f32.mrf.mxu0
        %1739 = vmatprep.mubr.bf16.mxu0 0
        %1740 = vmatmul.mubr.bf16.gmra.mxu0 %v1016
        %v1741 = vpop.f32.mrf.mxu0
        %v1742 = vadd.f32 0.0, %v1741
        %v1743 = vpop.f32.mrf.mxu0
        %v1744 = vpop.f32.mrf.mxu0
        %v1745 = vadd.f32 0.0, %v1744
        %v1746 = vpop.f32.mrf.mxu0
        %1747 = vmatprep.mubr.bf16.mxu0 0
        %1748 = vmatmul.mubr.bf16.gmra.mxu0 %v1019
        %v1749 = vpop.f32.mrf.mxu0
        %v1750 = vadd.f32 0.0, %v1749
        %v1751 = vpop.f32.mrf.mxu0
        %v1752 = vpop.f32.mrf.mxu0
        %v1753 = vadd.f32 0.0, %v1752
        %v1754 = vpop.f32.mrf.mxu0
        %1755 = vmatprep.mubr.bf16.mxu0 0
        %1756 = vmatmul.mubr.bf16.gmra.mxu0 %v1022
        %v1757 = vpop.f32.mrf.mxu0
        %v1758 = vadd.f32 0.0, %v1757
        %v1759 = vpop.f32.mrf.mxu0
        %v1760 = vpop.f32.mrf.mxu0
        %v1761 = vadd.f32 0.0, %v1760
        %v1762 = vpop.f32.mrf.mxu0
        %1763 = vmatprep.mubr.bf16.mxu0 0
        %1764 = vmatmul.mubr.bf16.gmra.mxu0 %v1025
        %v1765 = vpop.f32.mrf.mxu0
        %v1766 = vadd.f32 0.0, %v1765
        %v1767 = vpop.f32.mrf.mxu0
        %v1768 = vpop.f32.mrf.mxu0
        %v1769 = vadd.f32 0.0, %v1768
        %v1770 = vpop.f32.mrf.mxu0
        %1771 = vmatprep.mubr.bf16.mxu0 0
        %1772 = vmatmul.mubr.bf16.gmra.mxu0 %v1028
        %v1773 = vpop.f32.mrf.mxu0
        %v1774 = vadd.f32 0.0, %v1773
        %v1775 = vpop.f32.mrf.mxu0
        %v1776 = vpop.f32.mrf.mxu0
        %v1777 = vadd.f32 0.0, %v1776
        %v1778 = vpop.f32.mrf.mxu0
        %1779 = vmatprep.mubr.bf16.mxu0 0
        %1780 = vmatmul.mubr.bf16.gmra.mxu0 %v1031
        %v1781 = vpop.f32.mrf.mxu0
        %v1782 = vadd.f32 0.0, %v1781
        %v1783 = vpop.f32.mrf.mxu0
        %v1784 = vpop.f32.mrf.mxu0
        %v1785 = vadd.f32 0.0, %v1784
        %v1786 = vpop.f32.mrf.mxu0
        %1787 = vmatprep.mubr.bf16.mxu0 0
        %1788 = vmatmul.mubr.bf16.gmra.mxu0 %v1630
        %v1789 = vpop.f32.mrf.mxu0
        %v1790 = vadd.f32 0.0, %v1789
        %v1791 = vpop.f32.mrf.mxu0
        %v1792 = vpop.f32.mrf.mxu0
        %v1793 = vadd.f32 0.0, %v1792
        %v1794 = vpop.f32.mrf.mxu0
        %1795 = vdwg.mxu0
        %v1796 = vadd.f32 %v1590, %v1670
        %v1797 = vadd.f32 %v1591, %v1673
        %v1798 = vadd.f32 %v1592, %v1678
        %v1799 = vadd.f32 %v1593, %v1681
        %v1800 = vadd.f32 %v1594, %v1686
        %v1801 = vadd.f32 %v1595, %v1689
        %v1802 = vadd.f32 %v1596, %v1694
        %v1803 = vadd.f32 %v1597, %v1697
        %v1804 = vadd.f32 %v1598, %v1702
        %v1805 = vadd.f32 %v1599, %v1705
        %v1806 = vadd.f32 %v1600, %v1710
        %v1807 = vadd.f32 %v1601, %v1713
        %v1808 = vadd.f32 %v1602, %v1718
        %v1809 = vadd.f32 %v1603, %v1721
        %v1810 = vadd.f32 %v1604, %v1726
        %v1811 = vadd.f32 %v1605, %v1729
        %v1812 = vadd.f32 %v1606, %v1734
        %v1813 = vadd.f32 %v1607, %v1737
        %v1814 = vadd.f32 %v1608, %v1742
        %v1815 = vadd.f32 %v1609, %v1745
        %v1816 = vadd.f32 %v1610, %v1750
        %v1817 = vadd.f32 %v1611, %v1753
        %v1818 = vadd.f32 %v1612, %v1758
        %v1819 = vadd.f32 %v1613, %v1761
        %v1820 = vadd.f32 %v1614, %v1766
        %v1821 = vadd.f32 %v1615, %v1769
        %v1822 = vadd.f32 %v1616, %v1774
        %v1823 = vadd.f32 %v1617, %v1777
        %v1824 = vadd.f32 %v1618, %v1782
        %v1825 = vadd.f32 %v1619, %v1785
        %v1826 = vadd.f32 %v1620, %v1790
        %v1827 = vadd.f32 %v1621, %v1793
        %v1829 = vshrl.u32 %v247, 16
        %v1831 = vrot.slane %v1829, 4
        %v1832 = vshll.u32 %v247, 16
        %v1834 = vrot.slane %v1832, 5
        %v1835 = vor.u32 %v1831, %v1834
        %v1836 = vrot.slane %v1835, 4
        %v1838 = vshll.u32 %v248, 16
        %v1840 = vrot.slane %v1838, 5
        %v1841 = vsel %vm256, %v1836, %v1840
        %v1842 = vshrl.u32 %v248, 16
        %v1844 = vrot.slane %v1842, 4
        %v1845 = vor.u32 %v1844, %v1840
        %v1846 = vrot.slane %v1845, 4
        %v1848 = vshll.u32 %v249, 16
        %v1850 = vrot.slane %v1848, 5
        %v1851 = vsel %vm256, %v1846, %v1850
        %s1852 = scalar_lea.vmem %s1, 8
        %v1853 = vld [vmem:[%s1852] sm:$0x3]
        %v1854 = vunpack.c.l.b16 %v1841
        %v1855 = vunpack.c.l.b16 %v1851
        %v1856 = vpack.c.b16 %v1855, %v1854
        %v1858 = vsel %vm691, %v1856, 0
        %v1861 = vsel %vm740, %v1853, 0
        %1863 = vmatprep.subr.bf16.mxu0 0
        %1864 = vmatpush1.bf16.msra.mxu0 0
        %1865 = vmatprep.subr.bf16.mxu0 0
        %1866 = vmatpush1.bf16.msra.mxu0 0
        %1867 = vmatprep.subr.bf16.mxu0 0
        %1868 = vmatpush1.bf16.msra.mxu0 0
        %1869 = vmatprep.subr.bf16.mxu0 0
        %1870 = vmatpush1.bf16.msra.mxu0 0
        %1871 = vmatprep.subr.bf16.mxu0 0
        %1872 = vmatpush1.bf16.msra.mxu0 0
        %1873 = vmatprep.subr.bf16.mxu0 0
        %1874 = vmatpush1.bf16.msra.mxu0 0
        %1875 = vmatprep.subr.bf16.mxu0 0
        %1876 = vmatpush1.bf16.msra.mxu0 0
        %1877 = vmatprep.subr.bf16.mxu0 0
        %1878 = vmatpush1.bf16.msra.mxu0 %v1861
        %1879 = vmatprep.subr.bf16.mxu0 0
        %1880 = vmatpush2.bf16.msra.mxu0 0
        %1881 = vmatprep.subr.bf16.mxu0 0
        %1882 = vmatpush2.bf16.msra.mxu0 0
        %1883 = vmatprep.subr.bf16.mxu0 0
        %1884 = vmatpush2.bf16.msra.mxu0 0
        %1885 = vmatprep.subr.bf16.mxu0 0
        %1886 = vmatpush2.bf16.msra.mxu0 0
        %1887 = vmatprep.subr.bf16.mxu0 0
        %1888 = vmatpush2.bf16.msra.mxu0 0
        %1889 = vmatprep.subr.bf16.mxu0 0
        %1890 = vmatpush2.bf16.msra.mxu0 0
        %1891 = vmatprep.subr.bf16.mxu0 0
        %1892 = vmatpush2.bf16.msra.mxu0 0
        %1893 = vmatprep.subr.bf16.mxu0 0
        %1894 = vmatpush2.bf16.msra.mxu0 0
        %1895 = vmatprep.mubr.bf16.mxu0 0
        %1896 = vmatmul.mubr.bf16.gmra.mxu0 %v696
        %v1897 = vpop.f32.mrf.mxu0
        %v1898 = vadd.f32 0.0, %v1897
        %v1899 = vpop.f32.mrf.mxu0
        %v1900 = vpop.f32.mrf.mxu0
        %v1901 = vadd.f32 0.0, %v1900
        %v1902 = vpop.f32.mrf.mxu0
        %1903 = vmatprep.mubr.bf16.mxu0 0
        %1904 = vmatmul.mubr.bf16.gmra.mxu0 %v699
        %v1905 = vpop.f32.mrf.mxu0
        %v1906 = vadd.f32 0.0, %v1905
        %v1907 = vpop.f32.mrf.mxu0
        %v1908 = vpop.f32.mrf.mxu0
        %v1909 = vadd.f32 0.0, %v1908
        %v1910 = vpop.f32.mrf.mxu0
        %1911 = vmatprep.mubr.bf16.mxu0 0
        %1912 = vmatmul.mubr.bf16.gmra.mxu0 %v702
        %v1913 = vpop.f32.mrf.mxu0
        %v1914 = vadd.f32 0.0, %v1913
        %v1915 = vpop.f32.mrf.mxu0
        %v1916 = vpop.f32.mrf.mxu0
        %v1917 = vadd.f32 0.0, %v1916
        %v1918 = vpop.f32.mrf.mxu0
        %1919 = vmatprep.mubr.bf16.mxu0 0
        %1920 = vmatmul.mubr.bf16.gmra.mxu0 %v705
        %v1921 = vpop.f32.mrf.mxu0
        %v1922 = vadd.f32 0.0, %v1921
        %v1923 = vpop.f32.mrf.mxu0
        %v1924 = vpop.f32.mrf.mxu0
        %v1925 = vadd.f32 0.0, %v1924
        %v1926 = vpop.f32.mrf.mxu0
        %1927 = vmatprep.mubr.bf16.mxu0 0
        %1928 = vmatmul.mubr.bf16.gmra.mxu0 %v708
        %v1929 = vpop.f32.mrf.mxu0
        %v1930 = vadd.f32 0.0, %v1929
        %v1931 = vpop.f32.mrf.mxu0
        %v1932 = vpop.f32.mrf.mxu0
        %v1933 = vadd.f32 0.0, %v1932
        %v1934 = vpop.f32.mrf.mxu0
        %1935 = vmatprep.mubr.bf16.mxu0 0
        %1936 = vmatmul.mubr.bf16.gmra.mxu0 %v711
        %v1937 = vpop.f32.mrf.mxu0
        %v1938 = vadd.f32 0.0, %v1937
        %v1939 = vpop.f32.mrf.mxu0
        %v1940 = vpop.f32.mrf.mxu0
        %v1941 = vadd.f32 0.0, %v1940
        %v1942 = vpop.f32.mrf.mxu0
        %1943 = vmatprep.mubr.bf16.mxu0 0
        %1944 = vmatmul.mubr.bf16.gmra.mxu0 %v714
        %v1945 = vpop.f32.mrf.mxu0
        %v1946 = vadd.f32 0.0, %v1945
        %v1947 = vpop.f32.mrf.mxu0
        %v1948 = vpop.f32.mrf.mxu0
        %v1949 = vadd.f32 0.0, %v1948
        %v1950 = vpop.f32.mrf.mxu0
        %1951 = vmatprep.mubr.bf16.mxu0 0
        %1952 = vmatmul.mubr.bf16.gmra.mxu0 %v717
        %v1953 = vpop.f32.mrf.mxu0
        %v1954 = vadd.f32 0.0, %v1953
        %v1955 = vpop.f32.mrf.mxu0
        %v1956 = vpop.f32.mrf.mxu0
        %v1957 = vadd.f32 0.0, %v1956
        %v1958 = vpop.f32.mrf.mxu0
        %1959 = vmatprep.mubr.bf16.mxu0 0
        %1960 = vmatmul.mubr.bf16.gmra.mxu0 %v720
        %v1961 = vpop.f32.mrf.mxu0
        %v1962 = vadd.f32 0.0, %v1961
        %v1963 = vpop.f32.mrf.mxu0
        %v1964 = vpop.f32.mrf.mxu0
        %v1965 = vadd.f32 0.0, %v1964
        %v1966 = vpop.f32.mrf.mxu0
        %1967 = vmatprep.mubr.bf16.mxu0 0
        %1968 = vmatmul.mubr.bf16.gmra.mxu0 %v723
        %v1969 = vpop.f32.mrf.mxu0
        %v1970 = vadd.f32 0.0, %v1969
        %v1971 = vpop.f32.mrf.mxu0
        %v1972 = vpop.f32.mrf.mxu0
        %v1973 = vadd.f32 0.0, %v1972
        %v1974 = vpop.f32.mrf.mxu0
        %1975 = vmatprep.mubr.bf16.mxu0 0
        %1976 = vmatmul.mubr.bf16.gmra.mxu0 %v726
        %v1977 = vpop.f32.mrf.mxu0
        %v1978 = vadd.f32 0.0, %v1977
        %v1979 = vpop.f32.mrf.mxu0
        %v1980 = vpop.f32.mrf.mxu0
        %v1981 = vadd.f32 0.0, %v1980
        %v1982 = vpop.f32.mrf.mxu0
        %1983 = vmatprep.mubr.bf16.mxu0 0
        %1984 = vmatmul.mubr.bf16.gmra.mxu0 %v729
        %v1985 = vpop.f32.mrf.mxu0
        %v1986 = vadd.f32 0.0, %v1985
        %v1987 = vpop.f32.mrf.mxu0
        %v1988 = vpop.f32.mrf.mxu0
        %v1989 = vadd.f32 0.0, %v1988
        %v1990 = vpop.f32.mrf.mxu0
        %1991 = vmatprep.mubr.bf16.mxu0 0
        %1992 = vmatmul.mubr.bf16.gmra.mxu0 %v732
        %v1993 = vpop.f32.mrf.mxu0
        %v1994 = vadd.f32 0.0, %v1993
        %v1995 = vpop.f32.mrf.mxu0
        %v1996 = vpop.f32.mrf.mxu0
        %v1997 = vadd.f32 0.0, %v1996
        %v1998 = vpop.f32.mrf.mxu0
        %1999 = vmatprep.mubr.bf16.mxu0 0
        %2000 = vmatmul.mubr.bf16.gmra.mxu0 %v735
        %v2001 = vpop.f32.mrf.mxu0
        %v2002 = vadd.f32 0.0, %v2001
        %v2003 = vpop.f32.mrf.mxu0
        %v2004 = vpop.f32.mrf.mxu0
        %v2005 = vadd.f32 0.0, %v2004
        %v2006 = vpop.f32.mrf.mxu0
        %2007 = vmatprep.mubr.bf16.mxu0 0
        %2008 = vmatmul.mubr.bf16.gmra.mxu0 %v738
        %v2009 = vpop.f32.mrf.mxu0
        %v2010 = vadd.f32 0.0, %v2009
        %v2011 = vpop.f32.mrf.mxu0
        %v2012 = vpop.f32.mrf.mxu0
        %v2013 = vadd.f32 0.0, %v2012
        %v2014 = vpop.f32.mrf.mxu0
        %2015 = vmatprep.mubr.bf16.mxu0 0
        %2016 = vmatmul.mubr.bf16.gmra.mxu0 %v1858
        %v2017 = vpop.f32.mrf.mxu0
        %v2018 = vadd.f32 0.0, %v2017
        %v2019 = vpop.f32.mrf.mxu0
        %v2020 = vpop.f32.mrf.mxu0
        %v2021 = vadd.f32 0.0, %v2020
        %v2022 = vpop.f32.mrf.mxu0
        %2023 = vdwg.mxu0
        %v2024 = vadd.f32 %v1796, %v1898
        %v2025 = vadd.f32 %v1797, %v1901
        %v2026 = vadd.f32 %v1798, %v1906
        %v2027 = vadd.f32 %v1799, %v1909
        %v2028 = vadd.f32 %v1800, %v1914
        %v2029 = vadd.f32 %v1801, %v1917
        %v2030 = vadd.f32 %v1802, %v1922
        %v2031 = vadd.f32 %v1803, %v1925
        %v2032 = vadd.f32 %v1804, %v1930
        %v2033 = vadd.f32 %v1805, %v1933
        %v2034 = vadd.f32 %v1806, %v1938
        %v2035 = vadd.f32 %v1807, %v1941
        %v2036 = vadd.f32 %v1808, %v1946
        %v2037 = vadd.f32 %v1809, %v1949
        %v2038 = vadd.f32 %v1810, %v1954
        %v2039 = vadd.f32 %v1811, %v1957
        %v2040 = vadd.f32 %v1812, %v1962
        %v2041 = vadd.f32 %v1813, %v1965
        %v2042 = vadd.f32 %v1814, %v1970
        %v2043 = vadd.f32 %v1815, %v1973
        %v2044 = vadd.f32 %v1816, %v1978
        %v2045 = vadd.f32 %v1817, %v1981
        %v2046 = vadd.f32 %v1818, %v1986
        %v2047 = vadd.f32 %v1819, %v1989
        %v2048 = vadd.f32 %v1820, %v1994
        %v2049 = vadd.f32 %v1821, %v1997
        %v2050 = vadd.f32 %v1822, %v2002
        %v2051 = vadd.f32 %v1823, %v2005
        %v2052 = vadd.f32 %v1824, %v2010
        %v2053 = vadd.f32 %v1825, %v2013
        %v2054 = vadd.f32 %v1826, %v2018
        %v2055 = vadd.f32 %v1827, %v2021
        %v2057 = vrot.slane %v247, 5
        %v2058 = vrot.slane %v2057, 4
        %v2059 = vrot.slane %v248, 5
        %v2060 = vsel %vm1215, %v2058, %v2059
        %v2061 = vrot.slane %v2059, 4
        %v2062 = vrot.slane %v249, 5
        %v2063 = vsel %vm1215, %v2061, %v2062
        %s2064 = scalar_lea.vmem %s1, 10
        %v2065 = vld [vmem:[%s2064] sm:$0x3]
        %v2066 = vunpack.c.l.b16 %v2060
        %v2067 = vunpack.c.l.b16 %v2063
        %v2068 = vpack.c.b16 %v2067, %v2066
        %v2070 = vsel %vm691, %v2068, 0
        %v2073 = vsel %vm740, %v2065, 0
        %2075 = vmatprep.subr.bf16.mxu0 0
        %2076 = vmatpush1.bf16.msra.mxu0 0
        %2077 = vmatprep.subr.bf16.mxu0 0
        %2078 = vmatpush1.bf16.msra.mxu0 0
        %2079 = vmatprep.subr.bf16.mxu0 0
        %2080 = vmatpush1.bf16.msra.mxu0 0
        %2081 = vmatprep.subr.bf16.mxu0 0
        %2082 = vmatpush1.bf16.msra.mxu0 0
        %2083 = vmatprep.subr.bf16.mxu0 0
        %2084 = vmatpush1.bf16.msra.mxu0 0
        %2085 = vmatprep.subr.bf16.mxu0 0
        %2086 = vmatpush1.bf16.msra.mxu0 0
        %2087 = vmatprep.subr.bf16.mxu0 0
        %2088 = vmatpush1.bf16.msra.mxu0 0
        %2089 = vmatprep.subr.bf16.mxu0 0
        %2090 = vmatpush1.bf16.msra.mxu0 %v2073
        %2091 = vmatprep.subr.bf16.mxu0 0
        %2092 = vmatpush2.bf16.msra.mxu0 0
        %2093 = vmatprep.subr.bf16.mxu0 0
        %2094 = vmatpush2.bf16.msra.mxu0 0
        %2095 = vmatprep.subr.bf16.mxu0 0
        %2096 = vmatpush2.bf16.msra.mxu0 0
        %2097 = vmatprep.subr.bf16.mxu0 0
        %2098 = vmatpush2.bf16.msra.mxu0 0
        %2099 = vmatprep.subr.bf16.mxu0 0
        %2100 = vmatpush2.bf16.msra.mxu0 0
        %2101 = vmatprep.subr.bf16.mxu0 0
        %2102 = vmatpush2.bf16.msra.mxu0 0
        %2103 = vmatprep.subr.bf16.mxu0 0
        %2104 = vmatpush2.bf16.msra.mxu0 0
        %2105 = vmatprep.subr.bf16.mxu0 0
        %2106 = vmatpush2.bf16.msra.mxu0 0
        %2107 = vmatprep.mubr.bf16.mxu0 0
        %2108 = vmatmul.mubr.bf16.gmra.mxu0 %v1382
        %v2109 = vpop.f32.mrf.mxu0
        %v2110 = vadd.f32 0.0, %v2109
        %v2111 = vpop.f32.mrf.mxu0
        %v2112 = vpop.f32.mrf.mxu0
        %v2113 = vadd.f32 0.0, %v2112
        %v2114 = vpop.f32.mrf.mxu0
        %2115 = vmatprep.mubr.bf16.mxu0 0
        %2116 = vmatmul.mubr.bf16.gmra.mxu0 %v1385
        %v2117 = vpop.f32.mrf.mxu0
        %v2118 = vadd.f32 0.0, %v2117
        %v2119 = vpop.f32.mrf.mxu0
        %v2120 = vpop.f32.mrf.mxu0
        %v2121 = vadd.f32 0.0, %v2120
        %v2122 = vpop.f32.mrf.mxu0
        %2123 = vmatprep.mubr.bf16.mxu0 0
        %2124 = vmatmul.mubr.bf16.gmra.mxu0 %v1388
        %v2125 = vpop.f32.mrf.mxu0
        %v2126 = vadd.f32 0.0, %v2125
        %v2127 = vpop.f32.mrf.mxu0
        %v2128 = vpop.f32.mrf.mxu0
        %v2129 = vadd.f32 0.0, %v2128
        %v2130 = vpop.f32.mrf.mxu0
        %2131 = vmatprep.mubr.bf16.mxu0 0
        %2132 = vmatmul.mubr.bf16.gmra.mxu0 %v1391
        %v2133 = vpop.f32.mrf.mxu0
        %v2134 = vadd.f32 0.0, %v2133
        %v2135 = vpop.f32.mrf.mxu0
        %v2136 = vpop.f32.mrf.mxu0
        %v2137 = vadd.f32 0.0, %v2136
        %v2138 = vpop.f32.mrf.mxu0
        %2139 = vmatprep.mubr.bf16.mxu0 0
        %2140 = vmatmul.mubr.bf16.gmra.mxu0 %v1394
        %v2141 = vpop.f32.mrf.mxu0
        %v2142 = vadd.f32 0.0, %v2141
        %v2143 = vpop.f32.mrf.mxu0
        %v2144 = vpop.f32.mrf.mxu0
        %v2145 = vadd.f32 0.0, %v2144
        %v2146 = vpop.f32.mrf.mxu0
        %2147 = vmatprep.mubr.bf16.mxu0 0
        %2148 = vmatmul.mubr.bf16.gmra.mxu0 %v1397
        %v2149 = vpop.f32.mrf.mxu0
        %v2150 = vadd.f32 0.0, %v2149
        %v2151 = vpop.f32.mrf.mxu0
        %v2152 = vpop.f32.mrf.mxu0
        %v2153 = vadd.f32 0.0, %v2152
        %v2154 = vpop.f32.mrf.mxu0
        %2155 = vmatprep.mubr.bf16.mxu0 0
        %2156 = vmatmul.mubr.bf16.gmra.mxu0 %v1400
        %v2157 = vpop.f32.mrf.mxu0
        %v2158 = vadd.f32 0.0, %v2157
        %v2159 = vpop.f32.mrf.mxu0
        %v2160 = vpop.f32.mrf.mxu0
        %v2161 = vadd.f32 0.0, %v2160
        %v2162 = vpop.f32.mrf.mxu0
        %2163 = vmatprep.mubr.bf16.mxu0 0
        %2164 = vmatmul.mubr.bf16.gmra.mxu0 %v1403
        %v2165 = vpop.f32.mrf.mxu0
        %v2166 = vadd.f32 0.0, %v2165
        %v2167 = vpop.f32.mrf.mxu0
        %v2168 = vpop.f32.mrf.mxu0
        %v2169 = vadd.f32 0.0, %v2168
        %v2170 = vpop.f32.mrf.mxu0
        %2171 = vmatprep.mubr.bf16.mxu0 0
        %2172 = vmatmul.mubr.bf16.gmra.mxu0 %v1406
        %v2173 = vpop.f32.mrf.mxu0
        %v2174 = vadd.f32 0.0, %v2173
        %v2175 = vpop.f32.mrf.mxu0
        %v2176 = vpop.f32.mrf.mxu0
        %v2177 = vadd.f32 0.0, %v2176
        %v2178 = vpop.f32.mrf.mxu0
        %2179 = vmatprep.mubr.bf16.mxu0 0
        %2180 = vmatmul.mubr.bf16.gmra.mxu0 %v1409
        %v2181 = vpop.f32.mrf.mxu0
        %v2182 = vadd.f32 0.0, %v2181
        %v2183 = vpop.f32.mrf.mxu0
        %v2184 = vpop.f32.mrf.mxu0
        %v2185 = vadd.f32 0.0, %v2184
        %v2186 = vpop.f32.mrf.mxu0
        %2187 = vmatprep.mubr.bf16.mxu0 0
        %2188 = vmatmul.mubr.bf16.gmra.mxu0 %v1412
        %v2189 = vpop.f32.mrf.mxu0
        %v2190 = vadd.f32 0.0, %v2189
        %v2191 = vpop.f32.mrf.mxu0
        %v2192 = vpop.f32.mrf.mxu0
        %v2193 = vadd.f32 0.0, %v2192
        %v2194 = vpop.f32.mrf.mxu0
        %2195 = vmatprep.mubr.bf16.mxu0 0
        %2196 = vmatmul.mubr.bf16.gmra.mxu0 %v1415
        %v2197 = vpop.f32.mrf.mxu0
        %v2198 = vadd.f32 0.0, %v2197
        %v2199 = vpop.f32.mrf.mxu0
        %v2200 = vpop.f32.mrf.mxu0
        %v2201 = vadd.f32 0.0, %v2200
        %v2202 = vpop.f32.mrf.mxu0
        %2203 = vmatprep.mubr.bf16.mxu0 0
        %2204 = vmatmul.mubr.bf16.gmra.mxu0 %v1418
        %v2205 = vpop.f32.mrf.mxu0
        %v2206 = vadd.f32 0.0, %v2205
        %v2207 = vpop.f32.mrf.mxu0
        %v2208 = vpop.f32.mrf.mxu0
        %v2209 = vadd.f32 0.0, %v2208
        %v2210 = vpop.f32.mrf.mxu0
        %2211 = vmatprep.mubr.bf16.mxu0 0
        %2212 = vmatmul.mubr.bf16.gmra.mxu0 %v1421
        %v2213 = vpop.f32.mrf.mxu0
        %v2214 = vadd.f32 0.0, %v2213
        %v2215 = vpop.f32.mrf.mxu0
        %v2216 = vpop.f32.mrf.mxu0
        %v2217 = vadd.f32 0.0, %v2216
        %v2218 = vpop.f32.mrf.mxu0
        %2219 = vmatprep.mubr.bf16.mxu0 0
        %2220 = vmatmul.mubr.bf16.gmra.mxu0 %v1424
        %v2221 = vpop.f32.mrf.mxu0
        %v2222 = vadd.f32 0.0, %v2221
        %v2223 = vpop.f32.mrf.mxu0
        %v2224 = vpop.f32.mrf.mxu0
        %v2225 = vadd.f32 0.0, %v2224
        %v2226 = vpop.f32.mrf.mxu0
        %2227 = vmatprep.mubr.bf16.mxu0 0
        %2228 = vmatmul.mubr.bf16.gmra.mxu0 %v2070
        %v2229 = vpop.f32.mrf.mxu0
        %v2230 = vadd.f32 0.0, %v2229
        %v2231 = vpop.f32.mrf.mxu0
        %v2232 = vpop.f32.mrf.mxu0
        %v2233 = vadd.f32 0.0, %v2232
        %v2234 = vpop.f32.mrf.mxu0
        %2235 = vdwg.mxu0
        %v2236 = vadd.f32 %v2024, %v2110
        %v2237 = vadd.f32 %v2025, %v2113
        %v2238 = vadd.f32 %v2026, %v2118
        %v2239 = vadd.f32 %v2027, %v2121
        %v2240 = vadd.f32 %v2028, %v2126
        %v2241 = vadd.f32 %v2029, %v2129
        %v2242 = vadd.f32 %v2030, %v2134
        %v2243 = vadd.f32 %v2031, %v2137
        %v2244 = vadd.f32 %v2032, %v2142
        %v2245 = vadd.f32 %v2033, %v2145
        %v2246 = vadd.f32 %v2034, %v2150
        %v2247 = vadd.f32 %v2035, %v2153
        %v2248 = vadd.f32 %v2036, %v2158
        %v2249 = vadd.f32 %v2037, %v2161
        %v2250 = vadd.f32 %v2038, %v2166
        %v2251 = vadd.f32 %v2039, %v2169
        %v2252 = vadd.f32 %v2040, %v2174
        %v2253 = vadd.f32 %v2041, %v2177
        %v2254 = vadd.f32 %v2042, %v2182
        %v2255 = vadd.f32 %v2043, %v2185
        %v2256 = vadd.f32 %v2044, %v2190
        %v2257 = vadd.f32 %v2045, %v2193
        %v2258 = vadd.f32 %v2046, %v2198
        %v2259 = vadd.f32 %v2047, %v2201
        %v2260 = vadd.f32 %v2048, %v2206
        %v2261 = vadd.f32 %v2049, %v2209
        %v2262 = vadd.f32 %v2050, %v2214
        %v2263 = vadd.f32 %v2051, %v2217
        %v2264 = vadd.f32 %v2052, %v2222
        %v2265 = vadd.f32 %v2053, %v2225
        %v2266 = vadd.f32 %v2054, %v2230
        %v2267 = vadd.f32 %v2055, %v2233
        %s2268 = scalar_lea.vmem %s1, 12
        %v2269 = vld [vmem:[%s2268] sm:$0x3]
        %v2272 = vunpack.c.l.b16 %v250
        %v2273 = vunpack.c.l.b16 %v251
        %v2274 = vpack.c.b16 %v2273, %v2272
        %v2276 = vsel %vm691, %v2274, 0
        %v2279 = vsel %vm740, %v2269, 0
        %2281 = vmatprep.subr.bf16.mxu0 0
        %2282 = vmatpush1.bf16.msra.mxu0 0
        %2283 = vmatprep.subr.bf16.mxu0 0
        %2284 = vmatpush1.bf16.msra.mxu0 0
        %2285 = vmatprep.subr.bf16.mxu0 0
        %2286 = vmatpush1.bf16.msra.mxu0 0
        %2287 = vmatprep.subr.bf16.mxu0 0
        %2288 = vmatpush1.bf16.msra.mxu0 0
        %2289 = vmatprep.subr.bf16.mxu0 0
        %2290 = vmatpush1.bf16.msra.mxu0 0
        %2291 = vmatprep.subr.bf16.mxu0 0
        %2292 = vmatpush1.bf16.msra.mxu0 0
        %2293 = vmatprep.subr.bf16.mxu0 0
        %2294 = vmatpush1.bf16.msra.mxu0 0
        %2295 = vmatprep.subr.bf16.mxu0 0
        %2296 = vmatpush1.bf16.msra.mxu0 %v2279
        %2297 = vmatprep.subr.bf16.mxu0 0
        %2298 = vmatpush2.bf16.msra.mxu0 0
        %2299 = vmatprep.subr.bf16.mxu0 0
        %2300 = vmatpush2.bf16.msra.mxu0 0
        %2301 = vmatprep.subr.bf16.mxu0 0
        %2302 = vmatpush2.bf16.msra.mxu0 0
        %2303 = vmatprep.subr.bf16.mxu0 0
        %2304 = vmatpush2.bf16.msra.mxu0 0
        %2305 = vmatprep.subr.bf16.mxu0 0
        %2306 = vmatpush2.bf16.msra.mxu0 0
        %2307 = vmatprep.subr.bf16.mxu0 0
        %2308 = vmatpush2.bf16.msra.mxu0 0
        %2309 = vmatprep.subr.bf16.mxu0 0
        %2310 = vmatpush2.bf16.msra.mxu0 0
        %2311 = vmatprep.subr.bf16.mxu0 0
        %2312 = vmatpush2.bf16.msra.mxu0 0
        %2313 = vmatprep.mubr.bf16.mxu0 0
        %2314 = vmatmul.mubr.bf16.gmra.mxu0 %v992
        %v2315 = vpop.f32.mrf.mxu0
        %v2316 = vadd.f32 0.0, %v2315
        %v2317 = vpop.f32.mrf.mxu0
        %v2318 = vpop.f32.mrf.mxu0
        %v2319 = vadd.f32 0.0, %v2318
        %v2320 = vpop.f32.mrf.mxu0
        %2321 = vmatprep.mubr.bf16.mxu0 0
        %2322 = vmatmul.mubr.bf16.gmra.mxu0 %v995
        %v2323 = vpop.f32.mrf.mxu0
        %v2324 = vadd.f32 0.0, %v2323
        %v2325 = vpop.f32.mrf.mxu0
        %v2326 = vpop.f32.mrf.mxu0
        %v2327 = vadd.f32 0.0, %v2326
        %v2328 = vpop.f32.mrf.mxu0
        %2329 = vmatprep.mubr.bf16.mxu0 0
        %2330 = vmatmul.mubr.bf16.gmra.mxu0 %v998
        %v2331 = vpop.f32.mrf.mxu0
        %v2332 = vadd.f32 0.0, %v2331
        %v2333 = vpop.f32.mrf.mxu0
        %v2334 = vpop.f32.mrf.mxu0
        %v2335 = vadd.f32 0.0, %v2334
        %v2336 = vpop.f32.mrf.mxu0
        %2337 = vmatprep.mubr.bf16.mxu0 0
        %2338 = vmatmul.mubr.bf16.gmra.mxu0 %v1001
        %v2339 = vpop.f32.mrf.mxu0
        %v2340 = vadd.f32 0.0, %v2339
        %v2341 = vpop.f32.mrf.mxu0
        %v2342 = vpop.f32.mrf.mxu0
        %v2343 = vadd.f32 0.0, %v2342
        %v2344 = vpop.f32.mrf.mxu0
        %2345 = vmatprep.mubr.bf16.mxu0 0
        %2346 = vmatmul.mubr.bf16.gmra.mxu0 %v1004
        %v2347 = vpop.f32.mrf.mxu0
        %v2348 = vadd.f32 0.0, %v2347
        %v2349 = vpop.f32.mrf.mxu0
        %v2350 = vpop.f32.mrf.mxu0
        %v2351 = vadd.f32 0.0, %v2350
        %v2352 = vpop.f32.mrf.mxu0
        %2353 = vmatprep.mubr.bf16.mxu0 0
        %2354 = vmatmul.mubr.bf16.gmra.mxu0 %v1007
        %v2355 = vpop.f32.mrf.mxu0
        %v2356 = vadd.f32 0.0, %v2355
        %v2357 = vpop.f32.mrf.mxu0
        %v2358 = vpop.f32.mrf.mxu0
        %v2359 = vadd.f32 0.0, %v2358
        %v2360 = vpop.f32.mrf.mxu0
        %2361 = vmatprep.mubr.bf16.mxu0 0
        %2362 = vmatmul.mubr.bf16.gmra.mxu0 %v1010
        %v2363 = vpop.f32.mrf.mxu0
        %v2364 = vadd.f32 0.0, %v2363
        %v2365 = vpop.f32.mrf.mxu0
        %v2366 = vpop.f32.mrf.mxu0
        %v2367 = vadd.f32 0.0, %v2366
        %v2368 = vpop.f32.mrf.mxu0
        %2369 = vmatprep.mubr.bf16.mxu0 0
        %2370 = vmatmul.mubr.bf16.gmra.mxu0 %v1013
        %v2371 = vpop.f32.mrf.mxu0
        %v2372 = vadd.f32 0.0, %v2371
        %v2373 = vpop.f32.mrf.mxu0
        %v2374 = vpop.f32.mrf.mxu0
        %v2375 = vadd.f32 0.0, %v2374
        %v2376 = vpop.f32.mrf.mxu0
        %2377 = vmatprep.mubr.bf16.mxu0 0
        %2378 = vmatmul.mubr.bf16.gmra.mxu0 %v1016
        %v2379 = vpop.f32.mrf.mxu0
        %v2380 = vadd.f32 0.0, %v2379
        %v2381 = vpop.f32.mrf.mxu0
        %v2382 = vpop.f32.mrf.mxu0
        %v2383 = vadd.f32 0.0, %v2382
        %v2384 = vpop.f32.mrf.mxu0
        %2385 = vmatprep.mubr.bf16.mxu0 0
        %2386 = vmatmul.mubr.bf16.gmra.mxu0 %v1019
        %v2387 = vpop.f32.mrf.mxu0
        %v2388 = vadd.f32 0.0, %v2387
        %v2389 = vpop.f32.mrf.mxu0
        %v2390 = vpop.f32.mrf.mxu0
        %v2391 = vadd.f32 0.0, %v2390
        %v2392 = vpop.f32.mrf.mxu0
        %2393 = vmatprep.mubr.bf16.mxu0 0
        %2394 = vmatmul.mubr.bf16.gmra.mxu0 %v1022
        %v2395 = vpop.f32.mrf.mxu0
        %v2396 = vadd.f32 0.0, %v2395
        %v2397 = vpop.f32.mrf.mxu0
        %v2398 = vpop.f32.mrf.mxu0
        %v2399 = vadd.f32 0.0, %v2398
        %v2400 = vpop.f32.mrf.mxu0
        %2401 = vmatprep.mubr.bf16.mxu0 0
        %2402 = vmatmul.mubr.bf16.gmra.mxu0 %v1025
        %v2403 = vpop.f32.mrf.mxu0
        %v2404 = vadd.f32 0.0, %v2403
        %v2405 = vpop.f32.mrf.mxu0
        %v2406 = vpop.f32.mrf.mxu0
        %v2407 = vadd.f32 0.0, %v2406
        %v2408 = vpop.f32.mrf.mxu0
        %2409 = vmatprep.mubr.bf16.mxu0 0
        %2410 = vmatmul.mubr.bf16.gmra.mxu0 %v1028
        %v2411 = vpop.f32.mrf.mxu0
        %v2412 = vadd.f32 0.0, %v2411
        %v2413 = vpop.f32.mrf.mxu0
        %v2414 = vpop.f32.mrf.mxu0
        %v2415 = vadd.f32 0.0, %v2414
        %v2416 = vpop.f32.mrf.mxu0
        %2417 = vmatprep.mubr.bf16.mxu0 0
        %2418 = vmatmul.mubr.bf16.gmra.mxu0 %v1031
        %v2419 = vpop.f32.mrf.mxu0
        %v2420 = vadd.f32 0.0, %v2419
        %v2421 = vpop.f32.mrf.mxu0
        %v2422 = vpop.f32.mrf.mxu0
        %v2423 = vadd.f32 0.0, %v2422
        %v2424 = vpop.f32.mrf.mxu0
        %2425 = vmatprep.mubr.bf16.mxu0 0
        %2426 = vmatmul.mubr.bf16.gmra.mxu0 %v1630
        %v2427 = vpop.f32.mrf.mxu0
        %v2428 = vadd.f32 0.0, %v2427
        %v2429 = vpop.f32.mrf.mxu0
        %v2430 = vpop.f32.mrf.mxu0
        %v2431 = vadd.f32 0.0, %v2430
        %v2432 = vpop.f32.mrf.mxu0
        %2433 = vmatprep.mubr.bf16.mxu0 0
        %2434 = vmatmul.mubr.bf16.gmra.mxu0 %v2276
        %v2435 = vpop.f32.mrf.mxu0
        %v2436 = vadd.f32 0.0, %v2435
        %v2437 = vpop.f32.mrf.mxu0
        %v2438 = vpop.f32.mrf.mxu0
        %v2439 = vadd.f32 0.0, %v2438
        %v2440 = vpop.f32.mrf.mxu0
        %2441 = vdwg.mxu0
        %v2442 = vadd.f32 %v2236, %v2316
        %v2443 = vadd.f32 %v2237, %v2319
        %v2444 = vadd.f32 %v2238, %v2324
        %v2445 = vadd.f32 %v2239, %v2327
        %v2446 = vadd.f32 %v2240, %v2332
        %v2447 = vadd.f32 %v2241, %v2335
        %v2448 = vadd.f32 %v2242, %v2340
        %v2449 = vadd.f32 %v2243, %v2343
        %v2450 = vadd.f32 %v2244, %v2348
        %v2451 = vadd.f32 %v2245, %v2351
        %v2452 = vadd.f32 %v2246, %v2356
        %v2453 = vadd.f32 %v2247, %v2359
        %v2454 = vadd.f32 %v2248, %v2364
        %v2455 = vadd.f32 %v2249, %v2367
        %v2456 = vadd.f32 %v2250, %v2372
        %v2457 = vadd.f32 %v2251, %v2375
        %v2458 = vadd.f32 %v2252, %v2380
        %v2459 = vadd.f32 %v2253, %v2383
        %v2460 = vadd.f32 %v2254, %v2388
        %v2461 = vadd.f32 %v2255, %v2391
        %v2462 = vadd.f32 %v2256, %v2396
        %v2463 = vadd.f32 %v2257, %v2399
        %v2464 = vadd.f32 %v2258, %v2404
        %v2465 = vadd.f32 %v2259, %v2407
        %v2466 = vadd.f32 %v2260, %v2412
        %v2467 = vadd.f32 %v2261, %v2415
        %v2468 = vadd.f32 %v2262, %v2420
        %v2469 = vadd.f32 %v2263, %v2423
        %v2470 = vadd.f32 %v2264, %v2428
        %v2471 = vadd.f32 %v2265, %v2431
        %v2472 = vadd.f32 %v2266, %v2436
        %v2473 = vadd.f32 %v2267, %v2439
        %v2475 = vshrl.u32 %v250, 16
        %v2477 = vrot.slane %v2475, 4
        %v2478 = vshll.u32 %v250, 16
        %v2480 = vrot.slane %v2478, 5
        %v2481 = vor.u32 %v2477, %v2480
        %v2482 = vrot.slane %v2481, 4
        %v2484 = vshll.u32 %v251, 16
        %v2486 = vrot.slane %v2484, 5
        %v2487 = vsel %vm256, %v2482, %v2486
        %v2488 = vshrl.u32 %v251, 16
        %v2490 = vrot.slane %v2488, 4
        %v2491 = vor.u32 %v2490, %v2486
        %v2492 = vrot.slane %v2491, 4
        %v2494 = vshll.u32 %v252, 16
        %v2496 = vrot.slane %v2494, 5
        %v2497 = vsel %vm256, %v2492, %v2496
        %s2498 = scalar_lea.vmem %s1, 14
        %v2499 = vld [vmem:[%s2498] sm:$0x3]
        %v2500 = vunpack.c.l.b16 %v2487
        %v2501 = vunpack.c.l.b16 %v2497
        %v2502 = vpack.c.b16 %v2501, %v2500
        %v2504 = vsel %vm691, %v2502, 0
        %v2507 = vsel %vm740, %v2499, 0
        %2509 = vmatprep.subr.bf16.mxu0 0
        %2510 = vmatpush1.bf16.msra.mxu0 0
        %2511 = vmatprep.subr.bf16.mxu0 0
        %2512 = vmatpush1.bf16.msra.mxu0 0
        %2513 = vmatprep.subr.bf16.mxu0 0
        %2514 = vmatpush1.bf16.msra.mxu0 0
        %2515 = vmatprep.subr.bf16.mxu0 0
        %2516 = vmatpush1.bf16.msra.mxu0 0
        %2517 = vmatprep.subr.bf16.mxu0 0
        %2518 = vmatpush1.bf16.msra.mxu0 0
        %2519 = vmatprep.subr.bf16.mxu0 0
        %2520 = vmatpush1.bf16.msra.mxu0 0
        %2521 = vmatprep.subr.bf16.mxu0 0
        %2522 = vmatpush1.bf16.msra.mxu0 0
        %2523 = vmatprep.subr.bf16.mxu0 0
        %2524 = vmatpush1.bf16.msra.mxu0 %v2507
        %2525 = vmatprep.subr.bf16.mxu0 0
        %2526 = vmatpush2.bf16.msra.mxu0 0
        %2527 = vmatprep.subr.bf16.mxu0 0
        %2528 = vmatpush2.bf16.msra.mxu0 0
        %2529 = vmatprep.subr.bf16.mxu0 0
        %2530 = vmatpush2.bf16.msra.mxu0 0
        %2531 = vmatprep.subr.bf16.mxu0 0
        %2532 = vmatpush2.bf16.msra.mxu0 0
        %2533 = vmatprep.subr.bf16.mxu0 0
        %2534 = vmatpush2.bf16.msra.mxu0 0
        %2535 = vmatprep.subr.bf16.mxu0 0
        %2536 = vmatpush2.bf16.msra.mxu0 0
        %2537 = vmatprep.subr.bf16.mxu0 0
        %2538 = vmatpush2.bf16.msra.mxu0 0
        %2539 = vmatprep.subr.bf16.mxu0 0
        %2540 = vmatpush2.bf16.msra.mxu0 0
        %2541 = vmatprep.mubr.bf16.mxu0 0
        %2542 = vmatmul.mubr.bf16.gmra.mxu0 %v699
        %v2543 = vpop.f32.mrf.mxu0
        %v2544 = vadd.f32 0.0, %v2543
        %v2545 = vpop.f32.mrf.mxu0
        %v2546 = vpop.f32.mrf.mxu0
        %v2547 = vadd.f32 0.0, %v2546
        %v2548 = vpop.f32.mrf.mxu0
        %2549 = vmatprep.mubr.bf16.mxu0 0
        %2550 = vmatmul.mubr.bf16.gmra.mxu0 %v702
        %v2551 = vpop.f32.mrf.mxu0
        %v2552 = vadd.f32 0.0, %v2551
        %v2553 = vpop.f32.mrf.mxu0
        %v2554 = vpop.f32.mrf.mxu0
        %v2555 = vadd.f32 0.0, %v2554
        %v2556 = vpop.f32.mrf.mxu0
        %2557 = vmatprep.mubr.bf16.mxu0 0
        %2558 = vmatmul.mubr.bf16.gmra.mxu0 %v705
        %v2559 = vpop.f32.mrf.mxu0
        %v2560 = vadd.f32 0.0, %v2559
        %v2561 = vpop.f32.mrf.mxu0
        %v2562 = vpop.f32.mrf.mxu0
        %v2563 = vadd.f32 0.0, %v2562
        %v2564 = vpop.f32.mrf.mxu0
        %2565 = vmatprep.mubr.bf16.mxu0 0
        %2566 = vmatmul.mubr.bf16.gmra.mxu0 %v708
        %v2567 = vpop.f32.mrf.mxu0
        %v2568 = vadd.f32 0.0, %v2567
        %v2569 = vpop.f32.mrf.mxu0
        %v2570 = vpop.f32.mrf.mxu0
        %v2571 = vadd.f32 0.0, %v2570
        %v2572 = vpop.f32.mrf.mxu0
        %2573 = vmatprep.mubr.bf16.mxu0 0
        %2574 = vmatmul.mubr.bf16.gmra.mxu0 %v711
        %v2575 = vpop.f32.mrf.mxu0
        %v2576 = vadd.f32 0.0, %v2575
        %v2577 = vpop.f32.mrf.mxu0
        %v2578 = vpop.f32.mrf.mxu0
        %v2579 = vadd.f32 0.0, %v2578
        %v2580 = vpop.f32.mrf.mxu0
        %2581 = vmatprep.mubr.bf16.mxu0 0
        %2582 = vmatmul.mubr.bf16.gmra.mxu0 %v714
        %v2583 = vpop.f32.mrf.mxu0
        %v2584 = vadd.f32 0.0, %v2583
        %v2585 = vpop.f32.mrf.mxu0
        %v2586 = vpop.f32.mrf.mxu0
        %v2587 = vadd.f32 0.0, %v2586
        %v2588 = vpop.f32.mrf.mxu0
        %2589 = vmatprep.mubr.bf16.mxu0 0
        %2590 = vmatmul.mubr.bf16.gmra.mxu0 %v717
        %v2591 = vpop.f32.mrf.mxu0
        %v2592 = vadd.f32 0.0, %v2591
        %v2593 = vpop.f32.mrf.mxu0
        %v2594 = vpop.f32.mrf.mxu0
        %v2595 = vadd.f32 0.0, %v2594
        %v2596 = vpop.f32.mrf.mxu0
        %2597 = vmatprep.mubr.bf16.mxu0 0
        %2598 = vmatmul.mubr.bf16.gmra.mxu0 %v720
        %v2599 = vpop.f32.mrf.mxu0
        %v2600 = vadd.f32 0.0, %v2599
        %v2601 = vpop.f32.mrf.mxu0
        %v2602 = vpop.f32.mrf.mxu0
        %v2603 = vadd.f32 0.0, %v2602
        %v2604 = vpop.f32.mrf.mxu0
        %2605 = vmatprep.mubr.bf16.mxu0 0
        %2606 = vmatmul.mubr.bf16.gmra.mxu0 %v723
        %v2607 = vpop.f32.mrf.mxu0
        %v2608 = vadd.f32 0.0, %v2607
        %v2609 = vpop.f32.mrf.mxu0
        %v2610 = vpop.f32.mrf.mxu0
        %v2611 = vadd.f32 0.0, %v2610
        %v2612 = vpop.f32.mrf.mxu0
        %2613 = vmatprep.mubr.bf16.mxu0 0
        %2614 = vmatmul.mubr.bf16.gmra.mxu0 %v726
        %v2615 = vpop.f32.mrf.mxu0
        %v2616 = vadd.f32 0.0, %v2615
        %v2617 = vpop.f32.mrf.mxu0
        %v2618 = vpop.f32.mrf.mxu0
        %v2619 = vadd.f32 0.0, %v2618
        %v2620 = vpop.f32.mrf.mxu0
        %2621 = vmatprep.mubr.bf16.mxu0 0
        %2622 = vmatmul.mubr.bf16.gmra.mxu0 %v729
        %v2623 = vpop.f32.mrf.mxu0
        %v2624 = vadd.f32 0.0, %v2623
        %v2625 = vpop.f32.mrf.mxu0
        %v2626 = vpop.f32.mrf.mxu0
        %v2627 = vadd.f32 0.0, %v2626
        %v2628 = vpop.f32.mrf.mxu0
        %2629 = vmatprep.mubr.bf16.mxu0 0
        %2630 = vmatmul.mubr.bf16.gmra.mxu0 %v732
        %v2631 = vpop.f32.mrf.mxu0
        %v2632 = vadd.f32 0.0, %v2631
        %v2633 = vpop.f32.mrf.mxu0
        %v2634 = vpop.f32.mrf.mxu0
        %v2635 = vadd.f32 0.0, %v2634
        %v2636 = vpop.f32.mrf.mxu0
        %2637 = vmatprep.mubr.bf16.mxu0 0
        %2638 = vmatmul.mubr.bf16.gmra.mxu0 %v735
        %v2639 = vpop.f32.mrf.mxu0
        %v2640 = vadd.f32 0.0, %v2639
        %v2641 = vpop.f32.mrf.mxu0
        %v2642 = vpop.f32.mrf.mxu0
        %v2643 = vadd.f32 0.0, %v2642
        %v2644 = vpop.f32.mrf.mxu0
        %2645 = vmatprep.mubr.bf16.mxu0 0
        %2646 = vmatmul.mubr.bf16.gmra.mxu0 %v738
        %v2647 = vpop.f32.mrf.mxu0
        %v2648 = vadd.f32 0.0, %v2647
        %v2649 = vpop.f32.mrf.mxu0
        %v2650 = vpop.f32.mrf.mxu0
        %v2651 = vadd.f32 0.0, %v2650
        %v2652 = vpop.f32.mrf.mxu0
        %2653 = vmatprep.mubr.bf16.mxu0 0
        %2654 = vmatmul.mubr.bf16.gmra.mxu0 %v1858
        %v2655 = vpop.f32.mrf.mxu0
        %v2656 = vadd.f32 0.0, %v2655
        %v2657 = vpop.f32.mrf.mxu0
        %v2658 = vpop.f32.mrf.mxu0
        %v2659 = vadd.f32 0.0, %v2658
        %v2660 = vpop.f32.mrf.mxu0
        %2661 = vmatprep.mubr.bf16.mxu0 0
        %2662 = vmatmul.mubr.bf16.gmra.mxu0 %v2504
        %v2663 = vpop.f32.mrf.mxu0
        %v2664 = vadd.f32 0.0, %v2663
        %v2665 = vpop.f32.mrf.mxu0
        %v2666 = vpop.f32.mrf.mxu0
        %v2667 = vadd.f32 0.0, %v2666
        %v2668 = vpop.f32.mrf.mxu0
        %2669 = vdwg.mxu0
        %v2670 = vadd.f32 %v2442, %v2544
        %v2671 = vadd.f32 %v2443, %v2547
        %v2672 = vadd.f32 %v2444, %v2552
        %v2673 = vadd.f32 %v2445, %v2555
        %v2674 = vadd.f32 %v2446, %v2560
        %v2675 = vadd.f32 %v2447, %v2563
        %v2676 = vadd.f32 %v2448, %v2568
        %v2677 = vadd.f32 %v2449, %v2571
        %v2678 = vadd.f32 %v2450, %v2576
        %v2679 = vadd.f32 %v2451, %v2579
        %v2680 = vadd.f32 %v2452, %v2584
        %v2681 = vadd.f32 %v2453, %v2587
        %v2682 = vadd.f32 %v2454, %v2592
        %v2683 = vadd.f32 %v2455, %v2595
        %v2684 = vadd.f32 %v2456, %v2600
        %v2685 = vadd.f32 %v2457, %v2603
        %v2686 = vadd.f32 %v2458, %v2608
        %v2687 = vadd.f32 %v2459, %v2611
        %v2688 = vadd.f32 %v2460, %v2616
        %v2689 = vadd.f32 %v2461, %v2619
        %v2690 = vadd.f32 %v2462, %v2624
        %v2691 = vadd.f32 %v2463, %v2627
        %v2692 = vadd.f32 %v2464, %v2632
        %v2693 = vadd.f32 %v2465, %v2635
        %v2694 = vadd.f32 %v2466, %v2640
        %v2695 = vadd.f32 %v2467, %v2643
        %v2696 = vadd.f32 %v2468, %v2648
        %v2697 = vadd.f32 %v2469, %v2651
        %v2698 = vadd.f32 %v2470, %v2656
        %v2699 = vadd.f32 %v2471, %v2659
        %v2700 = vadd.f32 %v2472, %v2664
        %v2701 = vadd.f32 %v2473, %v2667
        %v2703 = vrot.slane %v250, 5
        %v2704 = vrot.slane %v2703, 4
        %v2705 = vrot.slane %v251, 5
        %v2706 = vsel %vm1215, %v2704, %v2705
        %v2707 = vrot.slane %v2705, 4
        %v2708 = vrot.slane %v252, 5
        %v2709 = vsel %vm1215, %v2707, %v2708
        %s2710 = scalar_lea.vmem %s1, 16
        %v2711 = vld [vmem:[%s2710] sm:$0x3]
        %v2712 = vunpack.c.l.b16 %v2706
        %v2713 = vunpack.c.l.b16 %v2709
        %v2714 = vpack.c.b16 %v2713, %v2712
        %v2716 = vsel %vm691, %v2714, 0
        %v2719 = vsel %vm740, %v2711, 0
        %2721 = vmatprep.subr.bf16.mxu0 0
        %2722 = vmatpush1.bf16.msra.mxu0 0
        %2723 = vmatprep.subr.bf16.mxu0 0
        %2724 = vmatpush1.bf16.msra.mxu0 0
        %2725 = vmatprep.subr.bf16.mxu0 0
        %2726 = vmatpush1.bf16.msra.mxu0 0
        %2727 = vmatprep.subr.bf16.mxu0 0
        %2728 = vmatpush1.bf16.msra.mxu0 0
        %2729 = vmatprep.subr.bf16.mxu0 0
        %2730 = vmatpush1.bf16.msra.mxu0 0
        %2731 = vmatprep.subr.bf16.mxu0 0
        %2732 = vmatpush1.bf16.msra.mxu0 0
        %2733 = vmatprep.subr.bf16.mxu0 0
        %2734 = vmatpush1.bf16.msra.mxu0 0
        %2735 = vmatprep.subr.bf16.mxu0 0
        %2736 = vmatpush1.bf16.msra.mxu0 %v2719
        %2737 = vmatprep.subr.bf16.mxu0 0
        %2738 = vmatpush2.bf16.msra.mxu0 0
        %2739 = vmatprep.subr.bf16.mxu0 0
        %2740 = vmatpush2.bf16.msra.mxu0 0
        %2741 = vmatprep.subr.bf16.mxu0 0
        %2742 = vmatpush2.bf16.msra.mxu0 0
        %2743 = vmatprep.subr.bf16.mxu0 0
        %2744 = vmatpush2.bf16.msra.mxu0 0
        %2745 = vmatprep.subr.bf16.mxu0 0
        %2746 = vmatpush2.bf16.msra.mxu0 0
        %2747 = vmatprep.subr.bf16.mxu0 0
        %2748 = vmatpush2.bf16.msra.mxu0 0
        %2749 = vmatprep.subr.bf16.mxu0 0
        %2750 = vmatpush2.bf16.msra.mxu0 0
        %2751 = vmatprep.subr.bf16.mxu0 0
        %2752 = vmatpush2.bf16.msra.mxu0 0
        %2753 = vmatprep.mubr.bf16.mxu0 0
        %2754 = vmatmul.mubr.bf16.gmra.mxu0 %v1385
        %v2755 = vpop.f32.mrf.mxu0
        %v2756 = vadd.f32 0.0, %v2755
        %v2757 = vpop.f32.mrf.mxu0
        %v2758 = vpop.f32.mrf.mxu0
        %v2759 = vadd.f32 0.0, %v2758
        %v2760 = vpop.f32.mrf.mxu0
        %2761 = vmatprep.mubr.bf16.mxu0 0
        %2762 = vmatmul.mubr.bf16.gmra.mxu0 %v1388
        %v2763 = vpop.f32.mrf.mxu0
        %v2764 = vadd.f32 0.0, %v2763
        %v2765 = vpop.f32.mrf.mxu0
        %v2766 = vpop.f32.mrf.mxu0
        %v2767 = vadd.f32 0.0, %v2766
        %v2768 = vpop.f32.mrf.mxu0
        %2769 = vmatprep.mubr.bf16.mxu0 0
        %2770 = vmatmul.mubr.bf16.gmra.mxu0 %v1391
        %v2771 = vpop.f32.mrf.mxu0
        %v2772 = vadd.f32 0.0, %v2771
        %v2773 = vpop.f32.mrf.mxu0
        %v2774 = vpop.f32.mrf.mxu0
        %v2775 = vadd.f32 0.0, %v2774
        %v2776 = vpop.f32.mrf.mxu0
        %2777 = vmatprep.mubr.bf16.mxu0 0
        %2778 = vmatmul.mubr.bf16.gmra.mxu0 %v1394
        %v2779 = vpop.f32.mrf.mxu0
        %v2780 = vadd.f32 0.0, %v2779
        %v2781 = vpop.f32.mrf.mxu0
        %v2782 = vpop.f32.mrf.mxu0
        %v2783 = vadd.f32 0.0, %v2782
        %v2784 = vpop.f32.mrf.mxu0
        %2785 = vmatprep.mubr.bf16.mxu0 0
        %2786 = vmatmul.mubr.bf16.gmra.mxu0 %v1397
        %v2787 = vpop.f32.mrf.mxu0
        %v2788 = vadd.f32 0.0, %v2787
        %v2789 = vpop.f32.mrf.mxu0
        %v2790 = vpop.f32.mrf.mxu0
        %v2791 = vadd.f32 0.0, %v2790
        %v2792 = vpop.f32.mrf.mxu0
        %2793 = vmatprep.mubr.bf16.mxu0 0
        %2794 = vmatmul.mubr.bf16.gmra.mxu0 %v1400
        %v2795 = vpop.f32.mrf.mxu0
        %v2796 = vadd.f32 0.0, %v2795
        %v2797 = vpop.f32.mrf.mxu0
        %v2798 = vpop.f32.mrf.mxu0
        %v2799 = vadd.f32 0.0, %v2798
        %v2800 = vpop.f32.mrf.mxu0
        %2801 = vmatprep.mubr.bf16.mxu0 0
        %2802 = vmatmul.mubr.bf16.gmra.mxu0 %v1403
        %v2803 = vpop.f32.mrf.mxu0
        %v2804 = vadd.f32 0.0, %v2803
        %v2805 = vpop.f32.mrf.mxu0
        %v2806 = vpop.f32.mrf.mxu0
        %v2807 = vadd.f32 0.0, %v2806
        %v2808 = vpop.f32.mrf.mxu0
        %2809 = vmatprep.mubr.bf16.mxu0 0
        %2810 = vmatmul.mubr.bf16.gmra.mxu0 %v1406
        %v2811 = vpop.f32.mrf.mxu0
        %v2812 = vadd.f32 0.0, %v2811
        %v2813 = vpop.f32.mrf.mxu0
        %v2814 = vpop.f32.mrf.mxu0
        %v2815 = vadd.f32 0.0, %v2814
        %v2816 = vpop.f32.mrf.mxu0
        %2817 = vmatprep.mubr.bf16.mxu0 0
        %2818 = vmatmul.mubr.bf16.gmra.mxu0 %v1409
        %v2819 = vpop.f32.mrf.mxu0
        %v2820 = vadd.f32 0.0, %v2819
        %v2821 = vpop.f32.mrf.mxu0
        %v2822 = vpop.f32.mrf.mxu0
        %v2823 = vadd.f32 0.0, %v2822
        %v2824 = vpop.f32.mrf.mxu0
        %2825 = vmatprep.mubr.bf16.mxu0 0
        %2826 = vmatmul.mubr.bf16.gmra.mxu0 %v1412
        %v2827 = vpop.f32.mrf.mxu0
        %v2828 = vadd.f32 0.0, %v2827
        %v2829 = vpop.f32.mrf.mxu0
        %v2830 = vpop.f32.mrf.mxu0
        %v2831 = vadd.f32 0.0, %v2830
        %v2832 = vpop.f32.mrf.mxu0
        %2833 = vmatprep.mubr.bf16.mxu0 0
        %2834 = vmatmul.mubr.bf16.gmra.mxu0 %v1415
        %v2835 = vpop.f32.mrf.mxu0
        %v2836 = vadd.f32 0.0, %v2835
        %v2837 = vpop.f32.mrf.mxu0
        %v2838 = vpop.f32.mrf.mxu0
        %v2839 = vadd.f32 0.0, %v2838
        %v2840 = vpop.f32.mrf.mxu0
        %2841 = vmatprep.mubr.bf16.mxu0 0
        %2842 = vmatmul.mubr.bf16.gmra.mxu0 %v1418
        %v2843 = vpop.f32.mrf.mxu0
        %v2844 = vadd.f32 0.0, %v2843
        %v2845 = vpop.f32.mrf.mxu0
        %v2846 = vpop.f32.mrf.mxu0
        %v2847 = vadd.f32 0.0, %v2846
        %v2848 = vpop.f32.mrf.mxu0
        %2849 = vmatprep.mubr.bf16.mxu0 0
        %2850 = vmatmul.mubr.bf16.gmra.mxu0 %v1421
        %v2851 = vpop.f32.mrf.mxu0
        %v2852 = vadd.f32 0.0, %v2851
        %v2853 = vpop.f32.mrf.mxu0
        %v2854 = vpop.f32.mrf.mxu0
        %v2855 = vadd.f32 0.0, %v2854
        %v2856 = vpop.f32.mrf.mxu0
        %2857 = vmatprep.mubr.bf16.mxu0 0
        %2858 = vmatmul.mubr.bf16.gmra.mxu0 %v1424
        %v2859 = vpop.f32.mrf.mxu0
        %v2860 = vadd.f32 0.0, %v2859
        %v2861 = vpop.f32.mrf.mxu0
        %v2862 = vpop.f32.mrf.mxu0
        %v2863 = vadd.f32 0.0, %v2862
        %v2864 = vpop.f32.mrf.mxu0
        %2865 = vmatprep.mubr.bf16.mxu0 0
        %2866 = vmatmul.mubr.bf16.gmra.mxu0 %v2070
        %v2867 = vpop.f32.mrf.mxu0
        %v2868 = vadd.f32 0.0, %v2867
        %v2869 = vpop.f32.mrf.mxu0
        %v2870 = vpop.f32.mrf.mxu0
        %v2871 = vadd.f32 0.0, %v2870
        %v2872 = vpop.f32.mrf.mxu0
        %2873 = vmatprep.mubr.bf16.mxu0 0
        %2874 = vmatmul.mubr.bf16.gmra.mxu0 %v2716
        %v2875 = vpop.f32.mrf.mxu0
        %v2876 = vadd.f32 0.0, %v2875
        %v2877 = vpop.f32.mrf.mxu0
        %v2878 = vpop.f32.mrf.mxu0
        %v2879 = vadd.f32 0.0, %v2878
        %v2880 = vpop.f32.mrf.mxu0
        %2881 = vdwg.mxu0
        %v2882 = vadd.f32 %v2670, %v2756
        %v2883 = vadd.f32 %v2671, %v2759
        %v2884 = vadd.f32 %v2672, %v2764
        %v2885 = vadd.f32 %v2673, %v2767
        %v2886 = vadd.f32 %v2674, %v2772
        %v2887 = vadd.f32 %v2675, %v2775
        %v2888 = vadd.f32 %v2676, %v2780
        %v2889 = vadd.f32 %v2677, %v2783
        %v2890 = vadd.f32 %v2678, %v2788
        %v2891 = vadd.f32 %v2679, %v2791
        %v2892 = vadd.f32 %v2680, %v2796
        %v2893 = vadd.f32 %v2681, %v2799
        %v2894 = vadd.f32 %v2682, %v2804
        %v2895 = vadd.f32 %v2683, %v2807
        %v2896 = vadd.f32 %v2684, %v2812
        %v2897 = vadd.f32 %v2685, %v2815
        %v2898 = vadd.f32 %v2686, %v2820
        %v2899 = vadd.f32 %v2687, %v2823
        %v2900 = vadd.f32 %v2688, %v2828
        %v2901 = vadd.f32 %v2689, %v2831
        %v2902 = vadd.f32 %v2690, %v2836
        %v2903 = vadd.f32 %v2691, %v2839
        %v2904 = vadd.f32 %v2692, %v2844
        %v2905 = vadd.f32 %v2693, %v2847
        %v2906 = vadd.f32 %v2694, %v2852
        %v2907 = vadd.f32 %v2695, %v2855
        %v2908 = vadd.f32 %v2696, %v2860
        %v2909 = vadd.f32 %v2697, %v2863
        %v2910 = vadd.f32 %v2698, %v2868
        %v2911 = vadd.f32 %v2699, %v2871
        %v2912 = vadd.f32 %v2700, %v2876
        %v2913 = vadd.f32 %v2701, %v2879
        %2914 = vst [vmem:[%s182] sm:$0xff] %v2882
        %2915 = vst [vmem:[%s182 + $0x8] sm:$0xff] %v2883
        %2916 = vst [vmem:[%s182 + $0x10] sm:$0xff] %v2884
        %2917 = vst [vmem:[%s182 + $0x18] sm:$0xff] %v2885
        %2918 = vst [vmem:[%s182 + $0x20] sm:$0xff] %v2886
        %2919 = vst [vmem:[%s182 + $0x28] sm:$0xff] %v2887
        %2920 = vst [vmem:[%s182 + $0x30] sm:$0xff] %v2888
        %2921 = vst [vmem:[%s182 + $0x38] sm:$0xff] %v2889
        %2922 = vst [vmem:[%s182 + $0x40] sm:$0xff] %v2890
        %2923 = vst [vmem:[%s182 + $0x48] sm:$0xff] %v2891
        %2924 = vst [vmem:[%s182 + $0x50] sm:$0xff] %v2892
        %2925 = vst [vmem:[%s182 + $0x58] sm:$0xff] %v2893
        %2926 = vst [vmem:[%s182 + $0x60] sm:$0xff] %v2894
        %2927 = vst [vmem:[%s182 + $0x68] sm:$0xff] %v2895
        %2928 = vst [vmem:[%s182 + $0x70] sm:$0xff] %v2896
        %2929 = vst [vmem:[%s182 + $0x78] sm:$0xff] %v2897
        %2930 = vst [vmem:[%s182 + $0x80] sm:$0xff] %v2898
        %2931 = vst [vmem:[%s182 + $0x88] sm:$0xff] %v2899
        %2932 = vst [vmem:[%s182 + $0x90] sm:$0xff] %v2900
        %2933 = vst [vmem:[%s182 + $0x98] sm:$0xff] %v2901
        %2934 = vst [vmem:[%s182 + $0xa0] sm:$0xff] %v2902
        %2935 = vst [vmem:[%s182 + $0xa8] sm:$0xff] %v2903
        %2936 = vst [vmem:[%s182 + $0xb0] sm:$0xff] %v2904
        %2937 = vst [vmem:[%s182 + $0xb8] sm:$0xff] %v2905
        %2938 = vst [vmem:[%s182 + $0xc0] sm:$0xff] %v2906
        %2939 = vst [vmem:[%s182 + $0xc8] sm:$0xff] %v2907
        %2940 = vst [vmem:[%s182 + $0xd0] sm:$0xff] %v2908
        %2941 = vst [vmem:[%s182 + $0xd8] sm:$0xff] %v2909
        %2942 = vst [vmem:[%s182 + $0xe0] sm:$0xff] %v2910
        %2943 = vst [vmem:[%s182 + $0xe8] sm:$0xff] %v2911
        %2944 = vst [vmem:[%s182 + $0xf0] sm:$0xff] %v2912
        %2945 = vst [vmem:[%s182 + $0xf8] sm:$0xff] %v2913
        %v2946 = vld [vmem:[#allocation4] sm:$0x1]
        %v2947 = vadd.f32 %v2882, %v2883
        %v2948 = vadd.f32 %v2947, %v2884
        %v2949 = vadd.f32 %v2948, %v2885
        %v2950 = vadd.f32 %v2949, %v2886
        %v2951 = vadd.f32 %v2950, %v2887
        %v2952 = vadd.f32 %v2951, %v2888
        %v2953 = vadd.f32 %v2952, %v2889
        %v2954 = vadd.f32 %v2953, %v2890
        %v2955 = vadd.f32 %v2954, %v2891
        %v2956 = vadd.f32 %v2955, %v2892
        %v2957 = vadd.f32 %v2956, %v2893
        %v2958 = vadd.f32 %v2957, %v2894
        %v2959 = vadd.f32 %v2958, %v2895
        %v2960 = vadd.f32 %v2959, %v2896
        %v2961 = vadd.f32 %v2960, %v2897
        %v2962 = vadd.f32 %v2961, %v2898
        %v2963 = vadd.f32 %v2962, %v2899
        %v2964 = vadd.f32 %v2963, %v2900
        %v2965 = vadd.f32 %v2964, %v2901
        %v2966 = vadd.f32 %v2965, %v2902
        %v2967 = vadd.f32 %v2966, %v2903
        %v2968 = vadd.f32 %v2967, %v2904
        %v2969 = vadd.f32 %v2968, %v2905
        %v2970 = vadd.f32 %v2969, %v2906
        %v2971 = vadd.f32 %v2970, %v2907
        %v2972 = vadd.f32 %v2971, %v2908
        %v2973 = vadd.f32 %v2972, %v2909
        %v2974 = vadd.f32 %v2973, %v2910
        %v2975 = vadd.f32 %v2974, %v2911
        %v2976 = vadd.f32 %v2975, %v2912
        %v2977 = vadd.f32 %v2976, %v2913
        %v2978 = vrot.slane %v2977, 4
        %v2979 = vadd.f32 %v2977, %v2978
        %v2980 = vrot.slane %v2979, 2
        %v2981 = vadd.f32 %v2979, %v2980
        %v2982 = vrot.slane %v2981, 1
        %v2983 = vadd.f32 %v2981, %v2982
        %v2984 = vadd.f32 %v2946, %v2983
        %2985 = vst [vmem:[#allocation4] sm:$0x1] %v2984
        %v2986 = vld [vmem:[#allocation6] sm:$0x1]
        %v2987 = vmul.f32 %v2882, %v2882
        %v2988 = vmul.f32 %v2883, %v2883
        %v2989 = vmul.f32 %v2884, %v2884
        %v2990 = vmul.f32 %v2885, %v2885
        %v2991 = vmul.f32 %v2886, %v2886
        %v2992 = vmul.f32 %v2887, %v2887
        %v2993 = vmul.f32 %v2888, %v2888
        %v2994 = vmul.f32 %v2889, %v2889
        %v2995 = vmul.f32 %v2890, %v2890
        %v2996 = vmul.f32 %v2891, %v2891
        %v2997 = vmul.f32 %v2892, %v2892
        %v2998 = vmul.f32 %v2893, %v2893
        %v2999 = vmul.f32 %v2894, %v2894
        %v3000 = vmul.f32 %v2895, %v2895
        %v3001 = vmul.f32 %v2896, %v2896
        %v3002 = vmul.f32 %v2897, %v2897
        %v3003 = vmul.f32 %v2898, %v2898
        %v3004 = vmul.f32 %v2899, %v2899
        %v3005 = vmul.f32 %v2900, %v2900
        %v3006 = vmul.f32 %v2901, %v2901
        %v3007 = vmul.f32 %v2902, %v2902
        %v3008 = vmul.f32 %v2903, %v2903
        %v3009 = vmul.f32 %v2904, %v2904
        %v3010 = vmul.f32 %v2905, %v2905
        %v3011 = vmul.f32 %v2906, %v2906
        %v3012 = vmul.f32 %v2907, %v2907
        %v3013 = vmul.f32 %v2908, %v2908
        %v3014 = vmul.f32 %v2909, %v2909
        %v3015 = vmul.f32 %v2910, %v2910
        %v3016 = vmul.f32 %v2911, %v2911
        %v3017 = vmul.f32 %v2912, %v2912
        %v3018 = vmul.f32 %v2913, %v2913
        %v3019 = vadd.f32 %v2987, %v2988
        %v3020 = vadd.f32 %v3019, %v2989
        %v3021 = vadd.f32 %v3020, %v2990
        %v3022 = vadd.f32 %v3021, %v2991
        %v3023 = vadd.f32 %v3022, %v2992
        %v3024 = vadd.f32 %v3023, %v2993
        %v3025 = vadd.f32 %v3024, %v2994
        %v3026 = vadd.f32 %v3025, %v2995
        %v3027 = vadd.f32 %v3026, %v2996
        %v3028 = vadd.f32 %v3027, %v2997
        %v3029 = vadd.f32 %v3028, %v2998
        %v3030 = vadd.f32 %v3029, %v2999
        %v3031 = vadd.f32 %v3030, %v3000
        %v3032 = vadd.f32 %v3031, %v3001
        %v3033 = vadd.f32 %v3032, %v3002
        %v3034 = vadd.f32 %v3033, %v3003
        %v3035 = vadd.f32 %v3034, %v3004
        %v3036 = vadd.f32 %v3035, %v3005
        %v3037 = vadd.f32 %v3036, %v3006
        %v3038 = vadd.f32 %v3037, %v3007
        %v3039 = vadd.f32 %v3038, %v3008
        %v3040 = vadd.f32 %v3039, %v3009
        %v3041 = vadd.f32 %v3040, %v3010
        %v3042 = vadd.f32 %v3041, %v3011
        %v3043 = vadd.f32 %v3042, %v3012
        %v3044 = vadd.f32 %v3043, %v3013
        %v3045 = vadd.f32 %v3044, %v3014
        %v3046 = vadd.f32 %v3045, %v3015
        %v3047 = vadd.f32 %v3046, %v3016
        %v3048 = vadd.f32 %v3047, %v3017
        %v3049 = vadd.f32 %v3048, %v3018
        %v3050 = vrot.slane %v3049, 4
        %v3051 = vadd.f32 %v3049, %v3050
        %v3052 = vrot.slane %v3051, 2
        %v3053 = vadd.f32 %v3051, %v3052
        %v3054 = vrot.slane %v3053, 1
        %v3055 = vadd.f32 %v3053, %v3054
        %v3056 = vadd.f32 %v2986, %v3055
        %3057 = vst [vmem:[#allocation6] sm:$0x1] %v3056
        %s3058 = sand.u32 %s75, 1
        %s3059 = scalar_lea.sflag [#allocation3], %s3058
        %s3060 = sand.u32 %s75, 1
        %s3061 = smul.addr %s3060, 256
        %s3062 = scalar_lea.vmem [#allocation2], %s3061
        // Predicated region
        $region33: #{tpu_custom_call.1} parent=27 // pred_check
          %p3063 = pneg %p85
        $region34: #{tpu_custom_call.1} parent=27 // pred_check_branch
          %3065 = sbr.rel (%p3063) target = $region36
        $region35: #{tpu_custom_call.1} parent=27 // pred_region
          %s3067 = ssub.s32 4096, 4096
          %3068 = vsyncadd %s3059, %s3067
          %s3069 = smul.addr %s20, 32
          %s3070 = smul.addr %s3069, 128
          %s3071 = scalar_lea.hbm %s2, %s3070
          %s3072 = sshll.u32 %s3062, 4
          %s3073 = int_to_ptr.vmem [resolvable:$true] %s3072
          %3078 = dma.vmem_to_hbm [thread:$0]  %s3073, 4096, %s3071, %s3059, 128, 128, 8
        $region36: #{tpu_custom_call.1} parent=27 // pred_fallthru
          _
        // Predicated region
        $region37: #{tpu_custom_call.1} parent=27 // pred_check
          %p3079 = pneg %p106
        $region38: #{tpu_custom_call.1} parent=27 // pred_check_branch
          %3081 = sbr.rel (%p3079) target = $region40
        $region39: #{tpu_custom_call.1} parent=27 // pred_region
          %s3083 = ssub.s32 16, 16
          %3084 = vsyncadd [#allocation5], %s3083
          %s3086 = sshll.u32 [#allocation4], 4
          %s3087 = int_to_ptr.vmem [resolvable:$true] %s3086
          %3089 = dma.vmem_to_hbm [thread:$0]  %s3087, 16, %s3, [#allocation5]
        $region40: #{tpu_custom_call.1} parent=27 // pred_fallthru
          _
        // Predicated region
        $region41: #{tpu_custom_call.1} parent=27 // pred_check
          %p3090 = pneg %p127
        $region42: #{tpu_custom_call.1} parent=27 // pred_check_branch
          %3092 = sbr.rel (%p3090) target = $region44
        $region43: #{tpu_custom_call.1} parent=27 // pred_region
          %s3094 = ssub.s32 16, 16
          %3095 = vsyncadd [#allocation5], %s3094
          %s3097 = sshll.u32 [#allocation6], 4
          %s3098 = int_to_ptr.vmem [resolvable:$true] %s3097
          %3100 = dma.vmem_to_hbm [thread:$0]  %s3098, 16, %s4, [#allocation5]
        $region44: #{tpu_custom_call.1} parent=27 // pred_fallthru
          _
        // Predicated region
        $region45: #{tpu_custom_call.1} parent=27 // pred_check
          %p3101 = pneg %p106
        $region46: #{tpu_custom_call.1} parent=27 // pred_check_branch
          %3103 = sbr.rel (%p3101) target = $region48
        $region47: #{tpu_custom_call.1} parent=27 // pred_region
          %3104 = dma.done [#allocation5], 16
        $region48: #{tpu_custom_call.1} parent=27 // pred_fallthru
          _
        // Predicated region
        $region49: #{tpu_custom_call.1} parent=27 // pred_check
          %p3105 = pneg %p127
        $region50: #{tpu_custom_call.1} parent=27 // pred_check_branch
          %3107 = sbr.rel (%p3105) target = $region52
        $region51: #{tpu_custom_call.1} parent=27 // pred_region
          %3108 = dma.done [#allocation5], 16
        $region52: #{tpu_custom_call.1} parent=27 // pred_fallthru
          _
      $region28: #{tpu_custom_call.1} parent=5 // pred_fallthru
        _
      %p3109 = scmp.le.s32.totalorder 2, %s15
      // Predicated region
      $region53: #{tpu_custom_call.1} parent=5 // pred_check
        %p3110 = pneg %p3109
      $region54: #{tpu_custom_call.1} parent=5 // pred_check_branch
        %3112 = sbr.rel (%p3110) target = $region56
      $region55: #{tpu_custom_call.1} parent=5 // pred_region
        %s3113 = ssub.s32 %s15, 2
        // Predicated region
        $region57: #{tpu_custom_call.1} parent=55 // pred_check
          %p3114 = pneg %p91
        $region58: #{tpu_custom_call.1} parent=55 // pred_check_branch
          %3116 = sbr.rel (%p3114) target = $region60
        $region59: #{tpu_custom_call.1} parent=55 // pred_region
          %s3117 = sand.u32 %s76, 1
          %s3118 = scalar_lea.sflag [#allocation3], %s3117
          %s3119 = sand.u32 %s76, 1
          %s3120 = smul.addr %s3119, 256
          %s3121 = scalar_lea.vmem [#allocation2], %s3120
          %3122 = dma.done %s3118, 4096
        $region60: #{tpu_custom_call.1} parent=55 // pred_fallthru
          _
      $region56: #{tpu_custom_call.1} parent=5 // pred_fallthru
        _
    $region6: #{tpu_custom_call.1} parent=1 // loop_footer
      %s19 = sadd.s32 1, %s15
    $region7: #{tpu_custom_call.1} parent=1 // loop_footer_branch
      %14 = sbr.rel target = $region3
    $region8: #{tpu_custom_call.1} parent=1 // loop_exit
      _
    %3123 = vsyncpa [#allocation3], 1
    %s3124 = scalar_lea.sflag [#allocation3], 1
    %3125 = vsyncpa %s3124, 1
    %3126 = vsyncpa [#allocation5], 1

</llo_original>
